<compile_context>
chip_gen: v7x
topology: tpu7x:2x2x1
jax: 0.10.0
libtpu: 0.0.40
codegen_flags: <defaults>
</compile_context>

<pallas_src>
import functools
import math
import re

import jax
import jax.numpy as jnp
from jax import lax
from jax.experimental import pallas as pl
from jax.experimental.pallas import tpu as pltpu


def _tpu_generation():
    """Best-effort TPU generation from device_kind ('TPU v5 lite'->5, 'TPU v6e'->6)."""
    try:
        kind = jax.devices()[0].device_kind.lower()
    except Exception:
        return 0
    m = re.search(r"(\d+)", kind)
    return int(m.group(1)) if m else 0


def _layer_norm(x, gamma, beta, eps=1e-5):
    # x: (TL, E) f32, gamma/beta: (1, E) f32
    mu = jnp.mean(x, axis=-1, keepdims=True)
    xc = x - mu
    var = jnp.mean(xc * xc, axis=-1, keepdims=True)
    return xc * lax.rsqrt(var + eps) * gamma + beta


def encoder_kernel(q_ref, k_ref, v_ref, mask_ref,
                   w1_ref, b1_ref, w2_ref, b2_ref,
                   g1_ref, be1_ref, g2_ref, be2_ref,
                   wo_ref, bo_ref,
                   y_ref, attn_ref, *, exp_dtype):
    # One grid step == (one batch element, one tile of query rows).
    q = q_ref[0].astype(jnp.float32)             # (TL, E) f32 for residual / LN
    mask = mask_ref[0].astype(jnp.float32)       # (TL, S) additive mask (bf16 in HBM)

    e_dim = q.shape[-1]
    scale = 1.0 / math.sqrt(e_dim)

    # MXU operands in bf16, accumulation in f32.  Fold 1/sqrt(E) into q once
    # (scales L*E elements instead of the L*S score matrix).
    q_s = (q * scale).astype(jnp.bfloat16)
    k = k_ref[0]                                 # (S, E) bf16 (cast on host)
    v = v_ref[0]                                 # (S, E) bf16 (cast on host)

    # scores = (q / sqrt(E)) @ k^T + mask : contract the LAST axis of both operands
    # (flash-attention-style einsum 'qd,kd->qk'), so no k transpose is materialized.
    scores = lax.dot_general(
        q_s, k, (((1,), (1,)), ((), ())),
        preferred_element_type=jnp.float32) + mask

    # Row softmax.  Max-subtract in f32; exp itself runs in bf16 on v6e/v7x (EUP
    # throughput), f32 elsewhere.  Row-sum + reciprocal stay f32.
    # NOTE: a fully -inf-masked row yields NaN, exactly like the PyTorch reference.
    scores = scores - jnp.max(scores, axis=-1, keepdims=True)
    p = jnp.exp(scores.astype(exp_dtype)).astype(jnp.float32)
    inv = pl.reciprocal(jnp.sum(p, axis=-1, keepdims=True), approx=True)
    attn = p * inv                               # (TL, S) f32
    attn_bf = attn.astype(jnp.bfloat16)          # feeds both PV matmul and the store

    out = jnp.dot(attn_bf, v, preferred_element_type=jnp.float32)   # (TL, E) f32

    # ---- residual + norm1 (f32) ----
    out = _layer_norm(out + q, g1_ref[...], be1_ref[...])

    # ---- feed-forward: fc2(relu(fc1(out))) (bf16 operands, f32 accumulate) ----
    h = jnp.dot(out.astype(jnp.bfloat16), w1_ref[...],
                preferred_element_type=jnp.float32) + b1_ref[...]
    h = jnp.maximum(h, 0.0)
    ff = jnp.dot(h.astype(jnp.bfloat16), w2_ref[...],
                 preferred_element_type=jnp.float32) + b2_ref[...]

    # ---- residual + norm2 ----
    out = _layer_norm(out + ff, g2_ref[...], be2_ref[...])

    # ---- output projection ----
    y = jnp.dot(out.astype(jnp.bfloat16), wo_ref[...],
                preferred_element_type=jnp.float32) + bo_ref[...]

    y_ref[0] = y.astype(y_ref.dtype)
    attn_ref[0] = attn_bf.astype(attn_ref.dtype)


@functools.partial(jax.jit, static_argnames=("l_tile",))
def encoder_forward(q, k, v, attn_mask, params, *, l_tile=None):
    B, L, E = q.shape
    _, S, _ = k.shape
    F = params["w1"].shape[1]

    gen = _tpu_generation()
    # Generation-aware defaults: smaller tiles / tighter cap on v7x (64 MiB VMEM per
    # TC, 2 TCs); fatter tiles and a higher cap on v5e/v6e (128 MiB VMEM).
    if l_tile is None:
        l_tile = 128 if gen >= 7 else 512
    cap_bytes = (48 << 20) if gen >= 7 else (100 << 20)
    exp_dtype = jnp.bfloat16 if gen >= 6 else jnp.float32   # bf16 EUP only on v6e+

    TL = L if L <= l_tile else l_tile
    # v7x megacore: make sure both TensorCores get parallel grid steps when B == 1.
    if gen >= 7 and B == 1 and TL >= L and L > 8:
        TL = ((L + 1) // 2 + 7) // 8 * 8

    resident_bytes = 2 * (E * F + F * E + E * E) + 4 * (F + 9 * E)

    def footprint(tl):
        # Per-step I/O blocks (double-buffered below): q/y f32, k/v/mask/attn bf16.
        blocks = tl * E * 8 + 2 * S * E * 2 + tl * S * 4
        # In-kernel temporaries: scores/p/attn (f32 + bf16), out/ln copies, h, casts.
        temps = (tl * S * (3 * 4 + 2 * 2)
                 + tl * E * (4 * 4 + 2 * 2)
                 + tl * F * (4 + 2))
        return 2 * blocks + 2 * resident_bytes + temps

    # Shrink the query tile until the estimated footprint fits this generation's cap.
    while TL > 8 and footprint(TL) > cap_bytes:
        TL = max(8, (TL // 2 + 7) // 8 * 8)
    n_l = pl.cdiv(L, TL)

    # Pre-cast pure-MXU / lane-stream operands to bf16 once on the host: halves the
    # k/v/weight DMA + VMEM residency and the mask read.  Mask bf16 is exact for
    # 0 / -inf style masks; arbitrary additive masks lose ~3 decimal digits.
    w1 = params["w1"].astype(jnp.bfloat16)
    w2 = params["w2"].astype(jnp.bfloat16)
    wo = params["wo"].astype(jnp.bfloat16)
    k_bf = k.astype(jnp.bfloat16)
    v_bf = v.astype(jnp.bfloat16)
    mask_bf = attn_mask.astype(jnp.bfloat16)

    rep = lambda shape: pl.BlockSpec(shape, lambda b, l: (0, 0))   # grid-resident

    grid_spec = pltpu.PrefetchScalarGridSpec(
        num_scalar_prefetch=0,
        grid=(B, n_l),
        in_specs=[
            pl.BlockSpec((1, TL, E), lambda b, l: (b, l, 0)),   # q     (tiled over L)
            pl.BlockSpec((1, S, E), lambda b, l: (b, 0, 0)),    # k     (resident over L)
            pl.BlockSpec((1, S, E), lambda b, l: (b, 0, 0)),    # v     (resident over L)
            pl.BlockSpec((1, TL, S), lambda b, l: (b, l, 0)),   # additive mask (bf16)
            rep((E, F)), rep((1, F)),                           # fc1 weight / bias
            rep((F, E)), rep((1, E)),                           # fc2 weight / bias
            rep((1, E)), rep((1, E)),                           # norm1 gamma / beta
            rep((1, E)), rep((1, E)),                           # norm2 gamma / beta
            rep((E, E)), rep((1, E)),                           # out proj weight / bias
        ],
        out_specs=[
            pl.BlockSpec((1, TL, E), lambda b, l: (b, l, 0)),   # y    (f32)
            pl.BlockSpec((1, TL, S), lambda b, l: (b, l, 0)),   # attn (bf16)
        ],
    )

    # Advisory cost hint for the XLA scheduler around the custom call.
    flops = 2 * B * L * (2 * S * E + 2 * E * F + E * E)
    bytes_accessed = (4 * 2 * B * L * E                        # q in, y out (f32)
                      + 2 * (2 * B * S * E + 2 * B * L * S)    # k,v,mask,attn (bf16)
                      + 2 * (E * F + F * E + E * E)            # bf16 weights
                      + 4 * (F + 9 * E))                       # f32 biases / affines
    cost = pl.CostEstimate(flops=flops, transcendentals=B * L * S,
                           bytes_accessed=bytes_accessed)

    return pl.pallas_call(
        functools.partial(encoder_kernel, exp_dtype=exp_dtype),
        out_shape=(
            jax.ShapeDtypeStruct((B, L, E), q.dtype),
            jax.ShapeDtypeStruct((B, L, S), jnp.bfloat16),
        ),
        grid_spec=grid_spec,
        compiler_params=pltpu.CompilerParams(
            dimension_semantics=("parallel", "parallel"),
            vmem_limit_bytes=int(cap_bytes)),
        cost_estimate=cost,
    )(q, k_bf, v_bf, mask_bf,
      w1, params["b1"], w2, params["b2"],
      params["g1"], params["be1"], params["g2"], params["be2"],
      wo, params["bo"])


def init_params(key, d_model, dim_feedforward):
    ks = jax.random.split(key, 6)
    s = 0.02
    return {
        # Linear weights stored as (in, out) == torch weight.T
        "w1": jax.random.normal(ks[0], (d_model, dim_feedforward), jnp.float32) * s,
        "b1": jnp.zeros((1, dim_feedforward), jnp.float32),
        "w2": jax.random.normal(ks[1], (dim_feedforward, d_model), jnp.float32) * s,
        "b2": jnp.zeros((1, d_model), jnp.float32),
        "g1": jnp.ones((1, d_model), jnp.float32),
        "be1": jnp.zeros((1, d_model), jnp.float32),
        "g2": jnp.ones((1, d_model), jnp.float32),
        "be2": jnp.zeros((1, d_model), jnp.float32),
        "wo": jax.random.normal(ks[2], (d_model, d_model), jnp.float32) * s,
        "bo": jnp.zeros((1, d_model), jnp.float32),
    }


def encoder_reference(q, k, v, mask, p):
    """Pure-JAX f32 reference for correctness checking."""
    E = q.shape[-1]
    scores = jnp.einsum("ble,bse->bls", q, k) / jnp.sqrt(jnp.float32(E)) + mask
    attn = jax.nn.softmax(scores, axis=-1)
    out = jnp.einsum("bls,bse->ble", attn, v) + q

    def ln(x, g, b):
        mu = jnp.mean(x, -1, keepdims=True)
        var = jnp.mean((x - mu) ** 2, -1, keepdims=True)
        return (x - mu) / jnp.sqrt(var + 1e-5) * g[0] + b[0]

    out = ln(out, p["g1"], p["be1"])
    ff = jnp.maximum(out @ p["w1"] + p["b1"][0], 0.0) @ p["w2"] + p["b2"][0]
    out = ln(out + ff, p["g2"], p["be2"])
    y = out @ p["wo"] + p["bo"][0]
    return y, attn


def _check(y, attn, q, k, v, mask, params):
    y_ref, attn_ref = encoder_reference(q, k, v, mask, params)
    # Tolerances cover bf16 MXU operands / bf16 exp / bf16 attn vs the f32 reference.
    assert jnp.allclose(y, y_ref, atol=4e-2, rtol=4e-2), "output mismatch"
    assert jnp.allclose(attn.astype(jnp.float32), attn_ref,
                        atol=3e-2, rtol=3e-2), "attn mismatch"


if __name__ == "__main__":
    key = jax.random.PRNGKey(0)

    # ---- case 1: small demo shapes, zero mask ----
    B, L, S = 2, 8, 8
    d_model, n_heads, dim_feedforward = 32, 4, 64   # dropout=0, mix=False
    kq, kk, kv, kp = jax.random.split(key, 4)
    q = jax.random.normal(kq, (B, L, d_model), jnp.float32)
    k = jax.random.normal(kk, (B, S, d_model), jnp.float32)
    v = jax.random.normal(kv, (B, S, d_model), jnp.float32)
    attn_mask = jnp.zeros((B, L, S), jnp.float32)
    params = init_params(kp, d_model, dim_feedforward)

    y, attn = encoder_forward(q, k, v, attn_mask, params)
    jax.block_until_ready((y, attn))
    _check(y, attn, q, k, v, attn_mask, params)

    # ---- case 2: non-divisible L (partial last tile) + causal-style additive mask ----
    B2, L2, S2 = 1, 12, 16
    kq2, kk2, kv2 = jax.random.split(jax.random.PRNGKey(1), 3)
    q2 = jax.random.normal(kq2, (B2, L2, d_model), jnp.float32)
    k2 = jax.random.normal(kk2, (B2, S2, d_model), jnp.float32)
    v2 = jax.random.normal(kv2, (B2, S2, d_model), jnp.float32)
    causal = jnp.where(jnp.arange(S2)[None, :] <= jnp.arange(L2)[:, None], 0.0, -1e9)
    mask2 = jnp.broadcast_to(causal, (B2, L2, S2)).astype(jnp.float32)

    y2, attn2 = encoder_forward(q2, k2, v2, mask2, params, l_tile=8)  # forces 2 L-tiles
    jax.block_until_ready((y2, attn2))
    _check(y2, attn2, q2, k2, v2, mask2, params)

    print("KERNEL_OK")
</pallas_src>

<mosaic_0001>
module attributes {stable_mosaic.version = 11 : i64} {
  func.func @encoder_kernel(%arg0: i32, %arg1: i32, %arg2: memref<1x8x32xf32, #tpu.memory_space<vmem>>, %arg3: memref<1x8x32xbf16, #tpu.memory_space<vmem>>, %arg4: memref<1x8x32xbf16, #tpu.memory_space<vmem>>, %arg5: memref<1x8x8xbf16, #tpu.memory_space<vmem>>, %arg6: memref<32x64xbf16, #tpu.memory_space<vmem>>, %arg7: memref<1x64xf32, #tpu.memory_space<vmem>>, %arg8: memref<64x32xbf16, #tpu.memory_space<vmem>>, %arg9: memref<1x32xf32, #tpu.memory_space<vmem>>, %arg10: memref<1x32xf32, #tpu.memory_space<vmem>>, %arg11: memref<1x32xf32, #tpu.memory_space<vmem>>, %arg12: memref<1x32xf32, #tpu.memory_space<vmem>>, %arg13: memref<1x32xf32, #tpu.memory_space<vmem>>, %arg14: memref<32x32xbf16, #tpu.memory_space<vmem>>, %arg15: memref<1x32xf32, #tpu.memory_space<vmem>>, %arg16: memref<1x8x32xf32, #tpu.memory_space<vmem>>, %arg17: memref<1x8x8xbf16, #tpu.memory_space<vmem>>) attributes {dimension_semantics = [#tpu.dimension_semantics<parallel>, #tpu.dimension_semantics<parallel>], iteration_bounds = array<i64: 2, 1>, scalar_prefetch = 0 : i64, scratch_operands = 0 : i64, tpu.core_type = #tpu.core_type<tc>, window_params = [{transform_indices = @transform_0, window_bounds = array<i64: 1, 8, 32>}, {transform_indices = @transform_1, window_bounds = array<i64: 1, 8, 32>}, {transform_indices = @transform_2, window_bounds = array<i64: 1, 8, 32>}, {transform_indices = @transform_3, window_bounds = array<i64: 1, 8, 8>}, {pipeline_mode = #tpu.pipeline_mode<synchronous>, transform_indices = @transform_4, window_bounds = array<i64: 32, 64>}, {pipeline_mode = #tpu.pipeline_mode<synchronous>, transform_indices = @transform_5, window_bounds = array<i64: 1, 64>}, {pipeline_mode = #tpu.pipeline_mode<synchronous>, transform_indices = @transform_6, window_bounds = array<i64: 64, 32>}, {pipeline_mode = #tpu.pipeline_mode<synchronous>, transform_indices = @transform_7, window_bounds = array<i64: 1, 32>}, {pipeline_mode = #tpu.pipeline_mode<synchronous>, transform_indices = @transform_8, window_bounds = array<i64: 1, 32>}, {pipeline_mode = #tpu.pipeline_mode<synchronous>, transform_indices = @transform_9, window_bounds = array<i64: 1, 32>}, {pipeline_mode = #tpu.pipeline_mode<synchronous>, transform_indices = @transform_10, window_bounds = array<i64: 1, 32>}, {pipeline_mode = #tpu.pipeline_mode<synchronous>, transform_indices = @transform_11, window_bounds = array<i64: 1, 32>}, {pipeline_mode = #tpu.pipeline_mode<synchronous>, transform_indices = @transform_12, window_bounds = array<i64: 32, 32>}, {pipeline_mode = #tpu.pipeline_mode<synchronous>, transform_indices = @transform_13, window_bounds = array<i64: 1, 32>}, {transform_indices = @transform_14, window_bounds = array<i64: 1, 8, 32>}, {transform_indices = @transform_15, window_bounds = array<i64: 1, 8, 8>}]} {
    %c0 = arith.constant 0 : index
    %c0_0 = arith.constant 0 : index
    %c0_1 = arith.constant 0 : index
    %0 = vector.load %arg2[%c0, %c0_0, %c0_1] : memref<1x8x32xf32, #tpu.memory_space<vmem>>, vector<1x8x32xf32>
    %1 = vector.shape_cast %0 : vector<1x8x32xf32> to vector<8x32xf32>
    %c0_2 = arith.constant 0 : index
    %c0_3 = arith.constant 0 : index
    %c0_4 = arith.constant 0 : index
    %2 = vector.load %arg5[%c0_2, %c0_3, %c0_4] : memref<1x8x8xbf16, #tpu.memory_space<vmem>>, vector<1x8x8xbf16>
    %3 = vector.shape_cast %2 : vector<1x8x8xbf16> to vector<8x8xbf16>
    %4 = arith.extf %3 : vector<8x8xbf16> to vector<8x8xf32>
    %cst = arith.constant 0.176776692 : f32
    %5 = vector.broadcast %cst : f32 to vector<8x32xf32>
    %6 = arith.mulf %1, %5 : vector<8x32xf32>
    %7 = arith.truncf %6 : vector<8x32xf32> to vector<8x32xbf16>
    %c0_5 = arith.constant 0 : index
    %c0_6 = arith.constant 0 : index
    %c0_7 = arith.constant 0 : index
    %8 = vector.load %arg3[%c0_5, %c0_6, %c0_7] : memref<1x8x32xbf16, #tpu.memory_space<vmem>>, vector<1x8x32xbf16>
    %9 = vector.shape_cast %8 : vector<1x8x32xbf16> to vector<8x32xbf16>
    %c0_8 = arith.constant 0 : index
    %c0_9 = arith.constant 0 : index
    %c0_10 = arith.constant 0 : index
    %10 = vector.load %arg4[%c0_8, %c0_9, %c0_10] : memref<1x8x32xbf16, #tpu.memory_space<vmem>>, vector<1x8x32xbf16>
    %11 = vector.shape_cast %10 : vector<1x8x32xbf16> to vector<8x32xbf16>
    %cst_11 = arith.constant dense<0.000000e+00> : vector<8x8xf32>
    %12 = tpu.matmul %7, %9, %cst_11 {dimension_numbers = #tpu.dot_dimension_numbers<[1], [1], [0], [0], [0, 0, 1, 0], [], []>} : vector<8x32xbf16>, vector<8x32xbf16>, vector<8x8xf32> -> vector<8x8xf32>
    %13 = arith.addf %12, %4 : vector<8x8xf32>
    %cst_12 = arith.constant dense<0xFF800000> : vector<8xf32>
    %14 = vector.multi_reduction <maximumf>, %13, %cst_12 [1] : vector<8x8xf32> to vector<8xf32>
    %15 = vector.shape_cast %14 : vector<8xf32> to vector<8x1xf32>
    %16 = vector.broadcast %15 : vector<8x1xf32> to vector<8x8xf32>
    %17 = arith.subf %13, %16 : vector<8x8xf32>
    %18 = math.exp %17 : vector<8x8xf32>
    %cst_13 = arith.constant dense<0.000000e+00> : vector<8xf32>
    %19 = vector.multi_reduction <add>, %18, %cst_13 [1] : vector<8x8xf32> to vector<8xf32>
    %20 = vector.shape_cast %19 : vector<8xf32> to vector<8x1xf32>
    %21 = tpu.reciprocal %20 {approx = true} : vector<8x1xf32> -> vector<8x1xf32>
    %22 = vector.broadcast %21 : vector<8x1xf32> to vector<8x8xf32>
    %23 = arith.mulf %18, %22 : vector<8x8xf32>
    %24 = arith.truncf %23 : vector<8x8xf32> to vector<8x8xbf16>
    %cst_14 = arith.constant dense<0.000000e+00> : vector<8x32xf32>
    %25 = tpu.matmul %24, %11, %cst_14 {dimension_numbers = #tpu.dot_dimension_numbers<[1], [0], [0], [1], [0, 0, 1, 1], [], []>} : vector<8x8xbf16>, vector<8x32xbf16>, vector<8x32xf32> -> vector<8x32xf32>
    %26 = arith.addf %25, %1 : vector<8x32xf32>
    %c0_15 = arith.constant 0 : index
    %c0_16 = arith.constant 0 : index
    %27 = vector.load %arg10[%c0_15, %c0_16] : memref<1x32xf32, #tpu.memory_space<vmem>>, vector<1x32xf32>
    %c0_17 = arith.constant 0 : index
    %c0_18 = arith.constant 0 : index
    %28 = vector.load %arg11[%c0_17, %c0_18] : memref<1x32xf32, #tpu.memory_space<vmem>>, vector<1x32xf32>
    %cst_19 = arith.constant dense<0.000000e+00> : vector<8xf32>
    %29 = vector.multi_reduction <add>, %26, %cst_19 [1] : vector<8x32xf32> to vector<8xf32>
    %30 = vector.shape_cast %29 : vector<8xf32> to vector<8x1xf32>
    %cst_20 = arith.constant 3.200000e+01 : f32
    %31 = vector.broadcast %cst_20 : f32 to vector<8x1xf32>
    %32 = arith.divf %30, %31 : vector<8x1xf32>
    %33 = vector.broadcast %32 : vector<8x1xf32> to vector<8x32xf32>
    %34 = arith.subf %26, %33 : vector<8x32xf32>
    %35 = arith.mulf %34, %34 : vector<8x32xf32>
    %cst_21 = arith.constant dense<0.000000e+00> : vector<8xf32>
    %36 = vector.multi_reduction <add>, %35, %cst_21 [1] : vector<8x32xf32> to vector<8xf32>
    %37 = vector.shape_cast %36 : vector<8xf32> to vector<8x1xf32>
    %cst_22 = arith.constant 3.200000e+01 : f32
    %38 = vector.broadcast %cst_22 : f32 to vector<8x1xf32>
    %39 = arith.divf %37, %38 : vector<8x1xf32>
    %cst_23 = arith.constant 9.99999974E-6 : f32
    %40 = vector.broadcast %cst_23 : f32 to vector<8x1xf32>
    %41 = arith.addf %39, %40 : vector<8x1xf32>
    %42 = math.rsqrt %41 : vector<8x1xf32>
    %43 = vector.broadcast %42 : vector<8x1xf32> to vector<8x32xf32>
    %44 = arith.mulf %34, %43 : vector<8x32xf32>
    %45 = vector.broadcast %27 : vector<1x32xf32> to vector<8x32xf32>
    %46 = arith.mulf %44, %45 : vector<8x32xf32>
    %47 = vector.broadcast %28 : vector<1x32xf32> to vector<8x32xf32>
    %48 = arith.addf %46, %47 : vector<8x32xf32>
    %49 = arith.truncf %48 : vector<8x32xf32> to vector<8x32xbf16>
    %c0_24 = arith.constant 0 : index
    %c0_25 = arith.constant 0 : index
    %50 = vector.load %arg6[%c0_24, %c0_25] : memref<32x64xbf16, #tpu.memory_space<vmem>>, vector<32x64xbf16>
    %cst_26 = arith.constant dense<0.000000e+00> : vector<8x64xf32>
    %51 = tpu.matmul %49, %50, %cst_26 {dimension_numbers = #tpu.dot_dimension_numbers<[1], [0], [0], [1], [0, 0, 1, 1], [], []>} : vector<8x32xbf16>, vector<32x64xbf16>, vector<8x64xf32> -> vector<8x64xf32>
    %c0_27 = arith.constant 0 : index
    %c0_28 = arith.constant 0 : index
    %52 = vector.load %arg7[%c0_27, %c0_28] : memref<1x64xf32, #tpu.memory_space<vmem>>, vector<1x64xf32>
    %53 = vector.broadcast %52 : vector<1x64xf32> to vector<8x64xf32>
    %54 = arith.addf %51, %53 : vector<8x64xf32>
    %cst_29 = arith.constant 0.000000e+00 : f32
    %55 = vector.broadcast %cst_29 : f32 to vector<8x64xf32>
    %56 = arith.maximumf %54, %55 : vector<8x64xf32>
    %57 = arith.truncf %56 : vector<8x64xf32> to vector<8x64xbf16>
    %c0_30 = arith.constant 0 : index
    %c0_31 = arith.constant 0 : index
    %58 = vector.load %arg8[%c0_30, %c0_31] : memref<64x32xbf16, #tpu.memory_space<vmem>>, vector<64x32xbf16>
    %cst_32 = arith.constant dense<0.000000e+00> : vector<8x32xf32>
    %59 = tpu.matmul %57, %58, %cst_32 {dimension_numbers = #tpu.dot_dimension_numbers<[1], [0], [0], [1], [0, 0, 1, 1], [], []>} : vector<8x64xbf16>, vector<64x32xbf16>, vector<8x32xf32> -> vector<8x32xf32>
    %c0_33 = arith.constant 0 : index
    %c0_34 = arith.constant 0 : index
    %60 = vector.load %arg9[%c0_33, %c0_34] : memref<1x32xf32, #tpu.memory_space<vmem>>, vector<1x32xf32>
    %61 = vector.broadcast %60 : vector<1x32xf32> to vector<8x32xf32>
    %62 = arith.addf %59, %61 : vector<8x32xf32>
    %63 = arith.addf %48, %62 : vector<8x32xf32>
    %c0_35 = arith.constant 0 : index
    %c0_36 = arith.constant 0 : index
    %64 = vector.load %arg12[%c0_35, %c0_36] : memref<1x32xf32, #tpu.memory_space<vmem>>, vector<1x32xf32>
    %c0_37 = arith.constant 0 : index
    %c0_38 = arith.constant 0 : index
    %65 = vector.load %arg13[%c0_37, %c0_38] : memref<1x32xf32, #tpu.memory_space<vmem>>, vector<1x32xf32>
    %cst_39 = arith.constant dense<0.000000e+00> : vector<8xf32>
    %66 = vector.multi_reduction <add>, %63, %cst_39 [1] : vector<8x32xf32> to vector<8xf32>
    %67 = vector.shape_cast %66 : vector<8xf32> to vector<8x1xf32>
    %cst_40 = arith.constant 3.200000e+01 : f32
    %68 = vector.broadcast %cst_40 : f32 to vector<8x1xf32>
    %69 = arith.divf %67, %68 : vector<8x1xf32>
    %70 = vector.broadcast %69 : vector<8x1xf32> to vector<8x32xf32>
    %71 = arith.subf %63, %70 : vector<8x32xf32>
    %72 = arith.mulf %71, %71 : vector<8x32xf32>
    %cst_41 = arith.constant dense<0.000000e+00> : vector<8xf32>
    %73 = vector.multi_reduction <add>, %72, %cst_41 [1] : vector<8x32xf32> to vector<8xf32>
    %74 = vector.shape_cast %73 : vector<8xf32> to vector<8x1xf32>
    %cst_42 = arith.constant 3.200000e+01 : f32
    %75 = vector.broadcast %cst_42 : f32 to vector<8x1xf32>
    %76 = arith.divf %74, %75 : vector<8x1xf32>
    %cst_43 = arith.constant 9.99999974E-6 : f32
    %77 = vector.broadcast %cst_43 : f32 to vector<8x1xf32>
    %78 = arith.addf %76, %77 : vector<8x1xf32>
    %79 = math.rsqrt %78 : vector<8x1xf32>
    %80 = vector.broadcast %79 : vector<8x1xf32> to vector<8x32xf32>
    %81 = arith.mulf %71, %80 : vector<8x32xf32>
    %82 = vector.broadcast %64 : vector<1x32xf32> to vector<8x32xf32>
    %83 = arith.mulf %81, %82 : vector<8x32xf32>
    %84 = vector.broadcast %65 : vector<1x32xf32> to vector<8x32xf32>
    %85 = arith.addf %83, %84 : vector<8x32xf32>
    %86 = arith.truncf %85 : vector<8x32xf32> to vector<8x32xbf16>
    %c0_44 = arith.constant 0 : index
    %c0_45 = arith.constant 0 : index
    %87 = vector.load %arg14[%c0_44, %c0_45] : memref<32x32xbf16, #tpu.memory_space<vmem>>, vector<32x32xbf16>
    %cst_46 = arith.constant dense<0.000000e+00> : vector<8x32xf32>
    %88 = tpu.matmul %86, %87, %cst_46 {dimension_numbers = #tpu.dot_dimension_numbers<[1], [0], [0], [1], [0, 0, 1, 1], [], []>} : vector<8x32xbf16>, vector<32x32xbf16>, vector<8x32xf32> -> vector<8x32xf32>
    %c0_47 = arith.constant 0 : index
    %c0_48 = arith.constant 0 : index
    %89 = vector.load %arg15[%c0_47, %c0_48] : memref<1x32xf32, #tpu.memory_space<vmem>>, vector<1x32xf32>
    %90 = vector.broadcast %89 : vector<1x32xf32> to vector<8x32xf32>
    %91 = arith.addf %88, %90 : vector<8x32xf32>
    %c0_49 = arith.constant 0 : index
    %c0_50 = arith.constant 0 : index
    %c0_51 = arith.constant 0 : index
    %92 = vector.load %arg16[%c0_49, %c0_50, %c0_51] : memref<1x8x32xf32, #tpu.memory_space<vmem>>, vector<1x8x32xf32>
    %93 = vector.shape_cast %92 : vector<1x8x32xf32> to vector<8x32xf32>
    %94 = vector.shape_cast %91 : vector<8x32xf32> to vector<1x8x32xf32>
    tpu.vector_store %arg16[%c0_49, %c0_50, %c0_51], %94 {strides = array<i32>} : memref<1x8x32xf32, #tpu.memory_space<vmem>>, vector<1x8x32xf32>,
    %c0_52 = arith.constant 0 : index
    %c0_53 = arith.constant 0 : index
    %c0_54 = arith.constant 0 : index
    %95 = vector.load %arg17[%c0_52, %c0_53, %c0_54] : memref<1x8x8xbf16, #tpu.memory_space<vmem>>, vector<1x8x8xbf16>
    %96 = vector.shape_cast %95 : vector<1x8x8xbf16> to vector<8x8xbf16>
    %97 = vector.shape_cast %24 : vector<8x8xbf16> to vector<1x8x8xbf16>
    tpu.vector_store %arg17[%c0_52, %c0_53, %c0_54], %97 {strides = array<i32>} : memref<1x8x8xbf16, #tpu.memory_space<vmem>>, vector<1x8x8xbf16>,
    return
  }
  func.func @transform_0(%arg0: i32, %arg1: i32) -> (i32, i32, i32) {
    %c0_i32 = arith.constant 0 : i32
    %c0_i32_0 = arith.constant 0 : i32
    return %arg0, %arg1, %c0_i32 : i32, i32, i32
  }
  func.func @transform_1(%arg0: i32, %arg1: i32) -> (i32, i32, i32) {
    %c0_i32 = arith.constant 0 : i32
    %c0_i32_0 = arith.constant 0 : i32
    %c0_i32_1 = arith.constant 0 : i32
    return %arg0, %c0_i32, %c0_i32_0 : i32, i32, i32
  }
  func.func @transform_2(%arg0: i32, %arg1: i32) -> (i32, i32, i32) {
    %c0_i32 = arith.constant 0 : i32
    %c0_i32_0 = arith.constant 0 : i32
    %c0_i32_1 = arith.constant 0 : i32
    return %arg0, %c0_i32, %c0_i32_0 : i32, i32, i32
  }
  func.func @transform_3(%arg0: i32, %arg1: i32) -> (i32, i32, i32) {
    %c0_i32 = arith.constant 0 : i32
    %c0_i32_0 = arith.constant 0 : i32
    return %arg0, %arg1, %c0_i32 : i32, i32, i32
  }
  func.func @transform_4(%arg0: i32, %arg1: i32) -> (i32, i32) {
    %c0_i32 = arith.constant 0 : i32
    %c0_i32_0 = arith.constant 0 : i32
    %c0_i32_1 = arith.constant 0 : i32
    return %c0_i32, %c0_i32_0 : i32, i32
  }
  func.func @transform_5(%arg0: i32, %arg1: i32) -> (i32, i32) {
    %c0_i32 = arith.constant 0 : i32
    %c0_i32_0 = arith.constant 0 : i32
    %c0_i32_1 = arith.constant 0 : i32
    return %c0_i32, %c0_i32_0 : i32, i32
  }
  func.func @transform_6(%arg0: i32, %arg1: i32) -> (i32, i32) {
    %c0_i32 = arith.constant 0 : i32
    %c0_i32_0 = arith.constant 0 : i32
    %c0_i32_1 = arith.constant 0 : i32
    return %c0_i32, %c0_i32_0 : i32, i32
  }
  func.func @transform_7(%arg0: i32, %arg1: i32) -> (i32, i32) {
    %c0_i32 = arith.constant 0 : i32
    %c0_i32_0 = arith.constant 0 : i32
    %c0_i32_1 = arith.constant 0 : i32
    return %c0_i32, %c0_i32_0 : i32, i32
  }
  func.func @transform_8(%arg0: i32, %arg1: i32) -> (i32, i32) {
    %c0_i32 = arith.constant 0 : i32
    %c0_i32_0 = arith.constant 0 : i32
    %c0_i32_1 = arith.constant 0 : i32
    return %c0_i32, %c0_i32_0 : i32, i32
  }
  func.func @transform_9(%arg0: i32, %arg1: i32) -> (i32, i32) {
    %c0_i32 = arith.constant 0 : i32
    %c0_i32_0 = arith.constant 0 : i32
    %c0_i32_1 = arith.constant 0 : i32
    return %c0_i32, %c0_i32_0 : i32, i32
  }
  func.func @transform_10(%arg0: i32, %arg1: i32) -> (i32, i32) {
    %c0_i32 = arith.constant 0 : i32
    %c0_i32_0 = arith.constant 0 : i32
    %c0_i32_1 = arith.constant 0 : i32
    return %c0_i32, %c0_i32_0 : i32, i32
  }
  func.func @transform_11(%arg0: i32, %arg1: i32) -> (i32, i32) {
    %c0_i32 = arith.constant 0 : i32
    %c0_i32_0 = arith.constant 0 : i32
    %c0_i32_1 = arith.constant 0 : i32
    return %c0_i32, %c0_i32_0 : i32, i32
  }
  func.func @transform_12(%arg0: i32, %arg1: i32) -> (i32, i32) {
    %c0_i32 = arith.constant 0 : i32
    %c0_i32_0 = arith.constant 0 : i32
    %c0_i32_1 = arith.constant 0 : i32
    return %c0_i32, %c0_i32_0 : i32, i32
  }
  func.func @transform_13(%arg0: i32, %arg1: i32) -> (i32, i32) {
    %c0_i32 = arith.constant 0 : i32
    %c0_i32_0 = arith.constant 0 : i32
    %c0_i32_1 = arith.constant 0 : i32
    return %c0_i32, %c0_i32_0 : i32, i32
  }
  func.func @transform_14(%arg0: i32, %arg1: i32) -> (i32, i32, i32) {
    %c0_i32 = arith.constant 0 : i32
    %c0_i32_0 = arith.constant 0 : i32
    return %arg0, %arg1, %c0_i32 : i32, i32, i32
  }
  func.func @transform_15(%arg0: i32, %arg1: i32) -> (i32, i32, i32) {
    %c0_i32 = arith.constant 0 : i32
    %c0_i32_0 = arith.constant 0 : i32
    return %arg0, %arg1, %c0_i32 : i32, i32, i32
  }
}

</mosaic_0001>

<llo_original>
// kernel: encoder_forward.1
$region0: #{encoder_forward.1}
  #allocation0 [shape = 'u32[]', space=smem, size = 0x4, offset = 0x4, fixed_abs, tag = 'smem constant byte address 0x4 - core index']
  #allocation1 [shape = 'u32[144,128]{1,0:T(1,128)}', space=vmem, size = 0x12000, scoped, tag = 'internal scratch']
  %s0 = inlined_call_operand.hbm [shape: f32[2,8,32], index: 0, kind: input, shape index: {}]
  %s1 = inlined_call_operand.hbm [shape: bf16[2,8,32], index: 1, kind: input, shape index: {}]
  %s2 = inlined_call_operand.hbm [shape: bf16[2,8,32], index: 2, kind: input, shape index: {}]
  %s3 = inlined_call_operand.hbm [shape: bf16[2,8,8], index: 3, kind: input, shape index: {}]
  %s4 = inlined_call_operand.hbm [shape: bf16[32,64], index: 4, kind: input, shape index: {}]
  %s5 = inlined_call_operand.hbm [shape: f32[1,64], index: 5, kind: input, shape index: {}]
  %s6 = inlined_call_operand.hbm [shape: bf16[64,32], index: 6, kind: input, shape index: {}]
  %s7 = inlined_call_operand.hbm [shape: f32[1,32], index: 7, kind: input, shape index: {}]
  %s8 = inlined_call_operand.hbm [shape: f32[1,32], index: 8, kind: input, shape index: {}]
  %s9 = inlined_call_operand.hbm [shape: f32[1,32], index: 9, kind: input, shape index: {}]
  %s10 = inlined_call_operand.hbm [shape: f32[1,32], index: 10, kind: input, shape index: {}]
  %s11 = inlined_call_operand.hbm [shape: f32[1,32], index: 11, kind: input, shape index: {}]
  %s12 = inlined_call_operand.hbm [shape: bf16[32,32], index: 12, kind: input, shape index: {}]
  %s13 = inlined_call_operand.hbm [shape: f32[1,32], index: 13, kind: input, shape index: {}]
  %s14 = inlined_call_operand.hbm [shape: f32[2,8,32], index: 14, kind: output, shape index: {0}]
  %s15 = inlined_call_operand.hbm [shape: bf16[2,8,8], index: 15, kind: output, shape index: {1}]
  %16 = xla_tuple %s14, %s15
  %s17 = sld [smem:[#allocation0]]
  $region153: #{encoder_forward.1} parent=0
    _
  %s19 = ssub.s32 1, %s17
  %s20 = scalar_select 0, %s19, %s17
  $region1: #{encoder_forward.1} parent=0
    #allocation2 [shape = 'u8[8192]{0}', space=vmem, size = 0x2000, scoped, tag = 'input window, operand 0']
    #allocation3 [shape = 's32[2]{0}', space=sflag, size = 0x8, scoped, tag = 'scoped memory for encoder_forward.1']
    #allocation4 [shape = 's32[2]{0}', space=sflag, size = 0x8, scoped, tag = 'scoped memory for encoder_forward.1']
    #allocation5 [shape = 'u8[4096]{0}', space=vmem, size = 0x1000, scoped, tag = 'input window, operand 1']
    #allocation6 [shape = 's32[2]{0}', space=sflag, size = 0x8, scoped, tag = 'scoped memory for encoder_forward.1']
    #allocation7 [shape = 'u8[4096]{0}', space=vmem, size = 0x1000, scoped, tag = 'input window, operand 2']
    #allocation8 [shape = 'u8[4096]{0}', space=vmem, size = 0x1000, scoped, tag = 'input window, operand 3']
    #allocation9 [shape = 's32[2]{0}', space=sflag, size = 0x8, scoped, tag = 'scoped memory for encoder_forward.1']
    #allocation10 [shape = 'u8[8192]{0}', space=vmem, size = 0x2000, scoped, tag = 'input window, operand 4, single buffered']
    #allocation11 [shape = 'u8[512]{0}', space=vmem, size = 0x400, scoped, tag = 'input window, operand 5, single buffered']
    #allocation12 [shape = 's32[1]{0}', space=sflag, size = 0x4, scoped, tag = 'scoped memory for encoder_forward.1']
    #allocation13 [shape = 'u8[16384]{0}', space=vmem, size = 0x4000, scoped, tag = 'input window, operand 6, single buffered']
    #allocation14 [shape = 'u8[512]{0}', space=vmem, size = 0x400, scoped, tag = 'input window, operand 7, single buffered']
    #allocation15 [shape = 's32[1]{0}', space=sflag, size = 0x4, scoped, tag = 'scoped memory for encoder_forward.1']
    #allocation16 [shape = 'u8[512]{0}', space=vmem, size = 0x400, scoped, tag = 'input window, operand 8, single buffered']
    #allocation17 [shape = 'u8[512]{0}', space=vmem, size = 0x400, scoped, tag = 'input window, operand 9, single buffered']
    #allocation18 [shape = 's32[1]{0}', space=sflag, size = 0x4, scoped, tag = 'scoped memory for encoder_forward.1']
    #allocation19 [shape = 'u8[512]{0}', space=vmem, size = 0x400, scoped, tag = 'input window, operand 10, single buffered']
    #allocation20 [shape = 'u8[512]{0}', space=vmem, size = 0x400, scoped, tag = 'input window, operand 11, single buffered']
    #allocation21 [shape = 's32[1]{0}', space=sflag, size = 0x4, scoped, tag = 'scoped memory for encoder_forward.1']
    #allocation22 [shape = 'u8[8192]{0}', space=vmem, size = 0x2000, scoped, tag = 'input window, operand 12, single buffered']
    #allocation23 [shape = 'u8[512]{0}', space=vmem, size = 0x400, scoped, tag = 'input window, operand 13, single buffered']
    #allocation24 [shape = 's32[1]{0}', space=sflag, size = 0x4, scoped, tag = 'scoped memory for encoder_forward.1']
    #allocation25 [shape = 'u8[8192]{0}', space=vmem, size = 0x2000, scoped, tag = 'output window, operand 0']
    #allocation26 [shape = 'u8[4096]{0}', space=vmem, size = 0x1000, scoped, tag = 'output window, operand 1']
    #allocation27 [shape = 's32[2]{0}', space=sflag, size = 0x8, scoped, tag = 'scoped memory for encoder_forward.1']
    %21 = vsyncpa [#allocation3], 0
    %s22 = scalar_lea.sflag [#allocation3], 1
    %23 = vsyncpa %s22, 0
    %24 = vsyncpa [#allocation6], 0
    %s25 = scalar_lea.sflag [#allocation6], 1
    %26 = vsyncpa %s25, 0
    %27 = vsyncpa [#allocation9], 0
    %s28 = scalar_lea.sflag [#allocation9], 1
    %29 = vsyncpa %s28, 0
    %30 = vsyncpa [#allocation12], 0
    %31 = vsyncpa [#allocation15], 0
    %32 = vsyncpa [#allocation18], 0
    %33 = vsyncpa [#allocation21], 0
    %34 = vsyncpa [#allocation24], 0
    %35 = vsyncpa [#allocation4], 0
    %s36 = scalar_lea.sflag [#allocation4], 1
    %37 = vsyncpa %s36, 0
    %38 = vsyncpa [#allocation27], 0
    %s39 = scalar_lea.sflag [#allocation27], 1
    %40 = vsyncpa %s39, 0
    loop: start=0, step=1, limit=4
    $region2: #{encoder_forward.1} parent=1 // loop_pre_header
      _
    $region3: #{encoder_forward.1} parent=1 // loop_header
      %s42 = sphi 0, %s46
      %p43 = scmp.ge.s32.totalorder %s42, 4
      %s49 = sphi 0, %s61
      %s50 = sphi 0, %s57
      %s51 = sphi 0, %s49
      %s52 = sphi 0, %s50
      %s53 = sphi 0, %s51
      %s54 = sphi 0, %s52
      %s66 = sphi 0, %s68
      %s69 = sphi 0, %s66
      %s70 = sphi 0, %s69
      %s86 = sphi 0, %s70
      %s92 = sphi 0, %s94
      %s95 = sphi 0, %s92
      %s96 = sphi 0, %s95
      %s112 = sphi 0, %s96
      %s118 = sphi 0, %s120
      %s121 = sphi 0, %s118
      %s122 = sphi 0, %s121
      %s138 = sphi 0, %s122
      %s146 = sphi 0, %s148
      %s149 = sphi 0, %s146
      %s150 = sphi 0, %s149
      %s166 = sphi 0, %s150
      %s170 = sphi 0, %s170
      %s172 = sphi 0, %s170
      %s173 = sphi 0, %s172
      %s187 = sphi 0, %s173
      %s191 = sphi 0, %s191
      %s193 = sphi 0, %s191
      %s194 = sphi 0, %s193
      %s208 = sphi 0, %s194
      %s212 = sphi 0, %s212
      %s214 = sphi 0, %s212
      %s215 = sphi 0, %s214
      %s229 = sphi 0, %s215
      %s233 = sphi 0, %s233
      %s235 = sphi 0, %s233
      %s236 = sphi 0, %s235
      %s250 = sphi 0, %s236
      %s254 = sphi 0, %s254
      %s256 = sphi 0, %s254
      %s257 = sphi 0, %s256
      %s271 = sphi 0, %s257
      %s275 = sphi 0, %s275
      %s277 = sphi 0, %s275
      %s278 = sphi 0, %s277
      %s292 = sphi 0, %s278
      %s296 = sphi 0, %s296
      %s298 = sphi 0, %s296
      %s299 = sphi 0, %s298
      %s313 = sphi 0, %s299
      %s317 = sphi 0, %s317
      %s319 = sphi 0, %s317
      %s320 = sphi 0, %s319
      %s334 = sphi 0, %s320
      %s338 = sphi 0, %s338
      %s340 = sphi 0, %s338
      %s341 = sphi 0, %s340
      %s355 = sphi 0, %s341
      %s359 = sphi 0, %s359
      %s361 = sphi 0, %s359
      %s362 = sphi 0, %s361
      %s376 = sphi 0, %s362
      %s384 = sphi 0, %s386
      %s387 = sphi 0, %s384
      %s388 = sphi 0, %s387
      %s404 = sphi 0, %s388
      %s412 = sphi 0, %s414
      %s415 = sphi 0, %s412
      %s416 = sphi 0, %s415
      %s432 = sphi 0, %s416
    $region4: #{encoder_forward.1} parent=1 // loop_header_branch
      %45 = sbr.rel (%p43) target = $region8
    $region5: #{encoder_forward.1} parent=1 // loop_body
      %s47 = ssub.s32 %s42, 1
      %s48 = ssub.s32 %s42, 2
      %s55 = sadd.s32 1, %s50
      %p56 = scmp.ge.s32.totalorder %s55, 1
      %s57 = scalar_select %p56, 0, %s55
      %s58 = sadd.s32 1, %s49
      %s59 = scalar_select %p56, %s58, %s49
      %p60 = scmp.ge.s32.totalorder %s59, 2
      %s61 = scalar_select %p60, 0, %s59
      %s62 = ssub.s32 %s49, %s61
      %s63 = ssub.s32 %s50, %s57
      %s64 = sor.u32 %s62, %s63
      %p65 = scmp.eq.s32.totalorder %s64, 0
      %s67 = sadd.s32 %s66, 1
      %s68 = scalar_select %p65, %s66, %s67
      %p71 = pneg %p65
      %p72 = scmp.eq.s32.totalorder %s42, 1
      %p73 = por %p71, %p72
      %p74 = scmp.ne.s32.totalorder %s66, %s69
      %p75 = scmp.eq.s32.totalorder %s42, 0
      %p76 = por %p74, %p75
      %p77 = scmp.ne.s32.totalorder %s66, %s69
      %p78 = scmp.eq.s32.totalorder %s47, 1
      %p79 = por %p77, %p78
      %p80 = scmp.ne.s32.totalorder %s69, %s70
      %p81 = scmp.eq.s32.totalorder %s47, 0
      %p82 = por %p80, %p81
      %p83 = scmp.ne.s32.totalorder %s69, %s70
      %p84 = scmp.eq.s32.totalorder %s48, 1
      %p85 = por %p83, %p84
      %p87 = scmp.ne.s32.totalorder %s70, %s86
      %p88 = scmp.eq.s32.totalorder %s48, 0
      %p89 = por %p87, %p88
      %s90 = ssub.s32 %s49, %s61
      %p91 = scmp.eq.s32.totalorder %s90, 0
      %s93 = sadd.s32 %s92, 1
      %s94 = scalar_select %p91, %s92, %s93
      %p97 = pneg %p91
      %p98 = scmp.eq.s32.totalorder %s42, 1
      %p99 = por %p97, %p98
      %p100 = scmp.ne.s32.totalorder %s92, %s95
      %p101 = scmp.eq.s32.totalorder %s42, 0
      %p102 = por %p100, %p101
      %p103 = scmp.ne.s32.totalorder %s92, %s95
      %p104 = scmp.eq.s32.totalorder %s47, 1
      %p105 = por %p103, %p104
      %p106 = scmp.ne.s32.totalorder %s95, %s96
      %p107 = scmp.eq.s32.totalorder %s47, 0
      %p108 = por %p106, %p107
      %p109 = scmp.ne.s32.totalorder %s95, %s96
      %p110 = scmp.eq.s32.totalorder %s48, 1
      %p111 = por %p109, %p110
      %p113 = scmp.ne.s32.totalorder %s96, %s112
      %p114 = scmp.eq.s32.totalorder %s48, 0
      %p115 = por %p113, %p114
      %s116 = ssub.s32 %s49, %s61
      %p117 = scmp.eq.s32.totalorder %s116, 0
      %s119 = sadd.s32 %s118, 1
      %s120 = scalar_select %p117, %s118, %s119
      %p123 = pneg %p117
      %p124 = scmp.eq.s32.totalorder %s42, 1
      %p125 = por %p123, %p124
      %p126 = scmp.ne.s32.totalorder %s118, %s121
      %p127 = scmp.eq.s32.totalorder %s42, 0
      %p128 = por %p126, %p127
      %p129 = scmp.ne.s32.totalorder %s118, %s121
      %p130 = scmp.eq.s32.totalorder %s47, 1
      %p131 = por %p129, %p130
      %p132 = scmp.ne.s32.totalorder %s121, %s122
      %p133 = scmp.eq.s32.totalorder %s47, 0
      %p134 = por %p132, %p133
      %p135 = scmp.ne.s32.totalorder %s121, %s122
      %p136 = scmp.eq.s32.totalorder %s48, 1
      %p137 = por %p135, %p136
      %p139 = scmp.ne.s32.totalorder %s122, %s138
      %p140 = scmp.eq.s32.totalorder %s48, 0
      %p141 = por %p139, %p140
      %s142 = ssub.s32 %s49, %s61
      %s143 = ssub.s32 %s50, %s57
      %s144 = sor.u32 %s142, %s143
      %p145 = scmp.eq.s32.totalorder %s144, 0
      %s147 = sadd.s32 %s146, 1
      %s148 = scalar_select %p145, %s146, %s147
      %p151 = pneg %p145
      %p152 = scmp.eq.s32.totalorder %s42, 1
      %p153 = por %p151, %p152
      %p154 = scmp.ne.s32.totalorder %s146, %s149
      %p155 = scmp.eq.s32.totalorder %s42, 0
      %p156 = por %p154, %p155
      %p157 = scmp.ne.s32.totalorder %s146, %s149
      %p158 = scmp.eq.s32.totalorder %s47, 1
      %p159 = por %p157, %p158
      %p160 = scmp.ne.s32.totalorder %s149, %s150
      %p161 = scmp.eq.s32.totalorder %s47, 0
      %p162 = por %p160, %p161
      %p163 = scmp.ne.s32.totalorder %s149, %s150
      %p164 = scmp.eq.s32.totalorder %s48, 1
      %p165 = por %p163, %p164
      %p167 = scmp.ne.s32.totalorder %s150, %s166
      %p168 = scmp.eq.s32.totalorder %s48, 0
      %p169 = por %p167, %p168
      %s171 = sadd.s32 %s170, 1
      %p174 = scmp.eq.s32.totalorder %s42, 1
      %p175 = scmp.ne.s32.totalorder %s170, %s172
      %p176 = scmp.eq.s32.totalorder %s42, 0
      %p177 = por %p175, %p176
      %p178 = scmp.ne.s32.totalorder %s170, %s172
      %p179 = scmp.eq.s32.totalorder %s47, 1
      %p180 = por %p178, %p179
      %p181 = scmp.ne.s32.totalorder %s172, %s173
      %p182 = scmp.eq.s32.totalorder %s47, 0
      %p183 = por %p181, %p182
      %p184 = scmp.ne.s32.totalorder %s172, %s173
      %p185 = scmp.eq.s32.totalorder %s48, 1
      %p186 = por %p184, %p185
      %p188 = scmp.ne.s32.totalorder %s173, %s187
      %p189 = scmp.eq.s32.totalorder %s48, 0
      %p190 = por %p188, %p189
      %s192 = sadd.s32 %s191, 1
      %p195 = scmp.eq.s32.totalorder %s42, 1
      %p196 = scmp.ne.s32.totalorder %s191, %s193
      %p197 = scmp.eq.s32.totalorder %s42, 0
      %p198 = por %p196, %p197
      %p199 = scmp.ne.s32.totalorder %s191, %s193
      %p200 = scmp.eq.s32.totalorder %s47, 1
      %p201 = por %p199, %p200
      %p202 = scmp.ne.s32.totalorder %s193, %s194
      %p203 = scmp.eq.s32.totalorder %s47, 0
      %p204 = por %p202, %p203
      %p205 = scmp.ne.s32.totalorder %s193, %s194
      %p206 = scmp.eq.s32.totalorder %s48, 1
      %p207 = por %p205, %p206
      %p209 = scmp.ne.s32.totalorder %s194, %s208
      %p210 = scmp.eq.s32.totalorder %s48, 0
      %p211 = por %p209, %p210
      %s213 = sadd.s32 %s212, 1
      %p216 = scmp.eq.s32.totalorder %s42, 1
      %p217 = scmp.ne.s32.totalorder %s212, %s214
      %p218 = scmp.eq.s32.totalorder %s42, 0
      %p219 = por %p217, %p218
      %p220 = scmp.ne.s32.totalorder %s212, %s214
      %p221 = scmp.eq.s32.totalorder %s47, 1
      %p222 = por %p220, %p221
      %p223 = scmp.ne.s32.totalorder %s214, %s215
      %p224 = scmp.eq.s32.totalorder %s47, 0
      %p225 = por %p223, %p224
      %p226 = scmp.ne.s32.totalorder %s214, %s215
      %p227 = scmp.eq.s32.totalorder %s48, 1
      %p228 = por %p226, %p227
      %p230 = scmp.ne.s32.totalorder %s215, %s229
      %p231 = scmp.eq.s32.totalorder %s48, 0
      %p232 = por %p230, %p231
      %s234 = sadd.s32 %s233, 1
      %p237 = scmp.eq.s32.totalorder %s42, 1
      %p238 = scmp.ne.s32.totalorder %s233, %s235
      %p239 = scmp.eq.s32.totalorder %s42, 0
      %p240 = por %p238, %p239
      %p241 = scmp.ne.s32.totalorder %s233, %s235
      %p242 = scmp.eq.s32.totalorder %s47, 1
      %p243 = por %p241, %p242
      %p244 = scmp.ne.s32.totalorder %s235, %s236
      %p245 = scmp.eq.s32.totalorder %s47, 0
      %p246 = por %p244, %p245
      %p247 = scmp.ne.s32.totalorder %s235, %s236
      %p248 = scmp.eq.s32.totalorder %s48, 1
      %p249 = por %p247, %p248
      %p251 = scmp.ne.s32.totalorder %s236, %s250
      %p252 = scmp.eq.s32.totalorder %s48, 0
      %p253 = por %p251, %p252
      %s255 = sadd.s32 %s254, 1
      %p258 = scmp.eq.s32.totalorder %s42, 1
      %p259 = scmp.ne.s32.totalorder %s254, %s256
      %p260 = scmp.eq.s32.totalorder %s42, 0
      %p261 = por %p259, %p260
      %p262 = scmp.ne.s32.totalorder %s254, %s256
      %p263 = scmp.eq.s32.totalorder %s47, 1
      %p264 = por %p262, %p263
      %p265 = scmp.ne.s32.totalorder %s256, %s257
      %p266 = scmp.eq.s32.totalorder %s47, 0
      %p267 = por %p265, %p266
      %p268 = scmp.ne.s32.totalorder %s256, %s257
      %p269 = scmp.eq.s32.totalorder %s48, 1
      %p270 = por %p268, %p269
      %p272 = scmp.ne.s32.totalorder %s257, %s271
      %p273 = scmp.eq.s32.totalorder %s48, 0
      %p274 = por %p272, %p273
      %s276 = sadd.s32 %s275, 1
      %p279 = scmp.eq.s32.totalorder %s42, 1
      %p280 = scmp.ne.s32.totalorder %s275, %s277
      %p281 = scmp.eq.s32.totalorder %s42, 0
      %p282 = por %p280, %p281
      %p283 = scmp.ne.s32.totalorder %s275, %s277
      %p284 = scmp.eq.s32.totalorder %s47, 1
      %p285 = por %p283, %p284
      %p286 = scmp.ne.s32.totalorder %s277, %s278
      %p287 = scmp.eq.s32.totalorder %s47, 0
      %p288 = por %p286, %p287
      %p289 = scmp.ne.s32.totalorder %s277, %s278
      %p290 = scmp.eq.s32.totalorder %s48, 1
      %p291 = por %p289, %p290
      %p293 = scmp.ne.s32.totalorder %s278, %s292
      %p294 = scmp.eq.s32.totalorder %s48, 0
      %p295 = por %p293, %p294
      %s297 = sadd.s32 %s296, 1
      %p300 = scmp.eq.s32.totalorder %s42, 1
      %p301 = scmp.ne.s32.totalorder %s296, %s298
      %p302 = scmp.eq.s32.totalorder %s42, 0
      %p303 = por %p301, %p302
      %p304 = scmp.ne.s32.totalorder %s296, %s298
      %p305 = scmp.eq.s32.totalorder %s47, 1
      %p306 = por %p304, %p305
      %p307 = scmp.ne.s32.totalorder %s298, %s299
      %p308 = scmp.eq.s32.totalorder %s47, 0
      %p309 = por %p307, %p308
      %p310 = scmp.ne.s32.totalorder %s298, %s299
      %p311 = scmp.eq.s32.totalorder %s48, 1
      %p312 = por %p310, %p311
      %p314 = scmp.ne.s32.totalorder %s299, %s313
      %p315 = scmp.eq.s32.totalorder %s48, 0
      %p316 = por %p314, %p315
      %s318 = sadd.s32 %s317, 1
      %p321 = scmp.eq.s32.totalorder %s42, 1
      %p322 = scmp.ne.s32.totalorder %s317, %s319
      %p323 = scmp.eq.s32.totalorder %s42, 0
      %p324 = por %p322, %p323
      %p325 = scmp.ne.s32.totalorder %s317, %s319
      %p326 = scmp.eq.s32.totalorder %s47, 1
      %p327 = por %p325, %p326
      %p328 = scmp.ne.s32.totalorder %s319, %s320
      %p329 = scmp.eq.s32.totalorder %s47, 0
      %p330 = por %p328, %p329
      %p331 = scmp.ne.s32.totalorder %s319, %s320
      %p332 = scmp.eq.s32.totalorder %s48, 1
      %p333 = por %p331, %p332
      %p335 = scmp.ne.s32.totalorder %s320, %s334
      %p336 = scmp.eq.s32.totalorder %s48, 0
      %p337 = por %p335, %p336
      %s339 = sadd.s32 %s338, 1
      %p342 = scmp.eq.s32.totalorder %s42, 1
      %p343 = scmp.ne.s32.totalorder %s338, %s340
      %p344 = scmp.eq.s32.totalorder %s42, 0
      %p345 = por %p343, %p344
      %p346 = scmp.ne.s32.totalorder %s338, %s340
      %p347 = scmp.eq.s32.totalorder %s47, 1
      %p348 = por %p346, %p347
      %p349 = scmp.ne.s32.totalorder %s340, %s341
      %p350 = scmp.eq.s32.totalorder %s47, 0
      %p351 = por %p349, %p350
      %p352 = scmp.ne.s32.totalorder %s340, %s341
      %p353 = scmp.eq.s32.totalorder %s48, 1
      %p354 = por %p352, %p353
      %p356 = scmp.ne.s32.totalorder %s341, %s355
      %p357 = scmp.eq.s32.totalorder %s48, 0
      %p358 = por %p356, %p357
      %s360 = sadd.s32 %s359, 1
      %p363 = scmp.eq.s32.totalorder %s42, 1
      %p364 = scmp.ne.s32.totalorder %s359, %s361
      %p365 = scmp.eq.s32.totalorder %s42, 0
      %p366 = por %p364, %p365
      %p367 = scmp.ne.s32.totalorder %s359, %s361
      %p368 = scmp.eq.s32.totalorder %s47, 1
      %p369 = por %p367, %p368
      %p370 = scmp.ne.s32.totalorder %s361, %s362
      %p371 = scmp.eq.s32.totalorder %s47, 0
      %p372 = por %p370, %p371
      %p373 = scmp.ne.s32.totalorder %s361, %s362
      %p374 = scmp.eq.s32.totalorder %s48, 1
      %p375 = por %p373, %p374
      %p377 = scmp.ne.s32.totalorder %s362, %s376
      %p378 = scmp.eq.s32.totalorder %s48, 0
      %p379 = por %p377, %p378
      %s380 = ssub.s32 %s49, %s61
      %s381 = ssub.s32 %s50, %s57
      %s382 = sor.u32 %s380, %s381
      %p383 = scmp.eq.s32.totalorder %s382, 0
      %s385 = sadd.s32 %s384, 1
      %s386 = scalar_select %p383, %s384, %s385
      %p389 = pneg %p383
      %p390 = scmp.eq.s32.totalorder %s42, 1
      %p391 = por %p389, %p390
      %p392 = scmp.ne.s32.totalorder %s384, %s387
      %p393 = scmp.eq.s32.totalorder %s42, 0
      %p394 = por %p392, %p393
      %p395 = scmp.ne.s32.totalorder %s384, %s387
      %p396 = scmp.eq.s32.totalorder %s47, 1
      %p397 = por %p395, %p396
      %p398 = scmp.ne.s32.totalorder %s387, %s388
      %p399 = scmp.eq.s32.totalorder %s47, 0
      %p400 = por %p398, %p399
      %p401 = scmp.ne.s32.totalorder %s387, %s388
      %p402 = scmp.eq.s32.totalorder %s48, 1
      %p403 = por %p401, %p402
      %p405 = scmp.ne.s32.totalorder %s388, %s404
      %p406 = scmp.eq.s32.totalorder %s48, 0
      %p407 = por %p405, %p406
      %s408 = ssub.s32 %s49, %s61
      %s409 = ssub.s32 %s50, %s57
      %s410 = sor.u32 %s408, %s409
      %p411 = scmp.eq.s32.totalorder %s410, 0
      %s413 = sadd.s32 %s412, 1
      %s414 = scalar_select %p411, %s412, %s413
      %p417 = pneg %p411
      %p418 = scmp.eq.s32.totalorder %s42, 1
      %p419 = por %p417, %p418
      %p420 = scmp.ne.s32.totalorder %s412, %s415
      %p421 = scmp.eq.s32.totalorder %s42, 0
      %p422 = por %p420, %p421
      %p423 = scmp.ne.s32.totalorder %s412, %s415
      %p424 = scmp.eq.s32.totalorder %s47, 1
      %p425 = por %p423, %p424
      %p426 = scmp.ne.s32.totalorder %s415, %s416
      %p427 = scmp.eq.s32.totalorder %s47, 0
      %p428 = por %p426, %p427
      %p429 = scmp.ne.s32.totalorder %s415, %s416
      %p430 = scmp.eq.s32.totalorder %s48, 1
      %p431 = por %p429, %p430
      %p433 = scmp.ne.s32.totalorder %s416, %s432
      %p434 = scmp.eq.s32.totalorder %s48, 0
      %p435 = por %p433, %p434
      %p436 = scmp.le.s32.totalorder 1, %s42
      %p437 = scmp.lt.s32.totalorder %s42, 3
      %p438 = pnand %p436, %p437
      %p439 = pneg %p438
      // Predicated region
      $region9: #{encoder_forward.1} parent=5 // pred_check
        _
      $region10: #{encoder_forward.1} parent=5 // pred_check_branch
        %441 = sbr.rel (%p438) target = $region12
      $region11: #{encoder_forward.1} parent=5 // pred_region
        %s442 = ssub.s32 %s42, 1
        // Predicated region
        $region13: #{encoder_forward.1} parent=11 // pred_check
          %p443 = pneg %p183
        $region14: #{encoder_forward.1} parent=11 // pred_check_branch
          %445 = sbr.rel (%p443) target = $region16
        $region15: #{encoder_forward.1} parent=11 // pred_region
          %s447 = ssub.s32 256, 256
          %448 = vsyncadd [#allocation9], %s447
          %s449 = sshll.u32 [#allocation10], 4
          %s450 = int_to_ptr.vmem [resolvable:$true] %s449
          %455 = dma.hbm_to_vmem [thread:$0]  %s4, 256, %s450, [#allocation9], 64, 64, 4
        $region16: #{encoder_forward.1} parent=11 // pred_fallthru
          _
        // Predicated region
        $region17: #{encoder_forward.1} parent=11 // pred_check
          %p456 = pneg %p204
        $region18: #{encoder_forward.1} parent=11 // pred_check_branch
          %458 = sbr.rel (%p456) target = $region20
        $region19: #{encoder_forward.1} parent=11 // pred_region
          %s460 = ssub.s32 16, 16
          %461 = vsyncadd [#allocation12], %s460
          %s463 = sshll.u32 [#allocation11], 4
          %s464 = int_to_ptr.vmem [resolvable:$true] %s463
          %466 = dma.hbm_to_vmem [thread:$0]  %s5, 16, %s464, [#allocation12]
        $region20: #{encoder_forward.1} parent=11 // pred_fallthru
          _
        // Predicated region
        $region21: #{encoder_forward.1} parent=11 // pred_check
          %p467 = pneg %p225
        $region22: #{encoder_forward.1} parent=11 // pred_check_branch
          %469 = sbr.rel (%p467) target = $region24
        $region23: #{encoder_forward.1} parent=11 // pred_region
          %s471 = ssub.s32 512, 512
          %472 = vsyncadd [#allocation12], %s471
          %s473 = sshll.u32 [#allocation13], 4
          %s474 = int_to_ptr.vmem [resolvable:$true] %s473
          %479 = dma.hbm_to_vmem [thread:$0]  %s6, 512, %s474, [#allocation12], 64, 64, 4
        $region24: #{encoder_forward.1} parent=11 // pred_fallthru
          _
        // Predicated region
        $region25: #{encoder_forward.1} parent=11 // pred_check
          %p480 = pneg %p246
        $region26: #{encoder_forward.1} parent=11 // pred_check_branch
          %482 = sbr.rel (%p480) target = $region28
        $region27: #{encoder_forward.1} parent=11 // pred_region
          %s484 = ssub.s32 16, 16
          %485 = vsyncadd [#allocation15], %s484
          %s487 = sshll.u32 [#allocation14], 4
          %s488 = int_to_ptr.vmem [resolvable:$true] %s487
          %490 = dma.hbm_to_vmem [thread:$0]  %s7, 16, %s488, [#allocation15]
        $region28: #{encoder_forward.1} parent=11 // pred_fallthru
          _
        // Predicated region
        $region29: #{encoder_forward.1} parent=11 // pred_check
          %p491 = pneg %p267
        $region30: #{encoder_forward.1} parent=11 // pred_check_branch
          %493 = sbr.rel (%p491) target = $region32
        $region31: #{encoder_forward.1} parent=11 // pred_region
          %s495 = ssub.s32 16, 16
          %496 = vsyncadd [#allocation15], %s495
          %s498 = sshll.u32 [#allocation16], 4
          %s499 = int_to_ptr.vmem [resolvable:$true] %s498
          %501 = dma.hbm_to_vmem [thread:$0]  %s8, 16, %s499, [#allocation15]
        $region32: #{encoder_forward.1} parent=11 // pred_fallthru
          _
        // Predicated region
        $region33: #{encoder_forward.1} parent=11 // pred_check
          %p502 = pneg %p288
        $region34: #{encoder_forward.1} parent=11 // pred_check_branch
          %504 = sbr.rel (%p502) target = $region36
        $region35: #{encoder_forward.1} parent=11 // pred_region
          %s506 = ssub.s32 16, 16
          %507 = vsyncadd [#allocation18], %s506
          %s509 = sshll.u32 [#allocation17], 4
          %s510 = int_to_ptr.vmem [resolvable:$true] %s509
          %512 = dma.hbm_to_vmem [thread:$0]  %s9, 16, %s510, [#allocation18]
        $region36: #{encoder_forward.1} parent=11 // pred_fallthru
          _
        // Predicated region
        $region37: #{encoder_forward.1} parent=11 // pred_check
          %p513 = pneg %p309
        $region38: #{encoder_forward.1} parent=11 // pred_check_branch
          %515 = sbr.rel (%p513) target = $region40
        $region39: #{encoder_forward.1} parent=11 // pred_region
          %s517 = ssub.s32 16, 16
          %518 = vsyncadd [#allocation18], %s517
          %s520 = sshll.u32 [#allocation19], 4
          %s521 = int_to_ptr.vmem [resolvable:$true] %s520
          %523 = dma.hbm_to_vmem [thread:$0]  %s10, 16, %s521, [#allocation18]
        $region40: #{encoder_forward.1} parent=11 // pred_fallthru
          _
        // Predicated region
        $region41: #{encoder_forward.1} parent=11 // pred_check
          %p524 = pneg %p330
        $region42: #{encoder_forward.1} parent=11 // pred_check_branch
          %526 = sbr.rel (%p524) target = $region44
        $region43: #{encoder_forward.1} parent=11 // pred_region
          %s528 = ssub.s32 16, 16
          %529 = vsyncadd [#allocation21], %s528
          %s531 = sshll.u32 [#allocation20], 4
          %s532 = int_to_ptr.vmem [resolvable:$true] %s531
          %534 = dma.hbm_to_vmem [thread:$0]  %s11, 16, %s532, [#allocation21]
        $region44: #{encoder_forward.1} parent=11 // pred_fallthru
          _
        // Predicated region
        $region45: #{encoder_forward.1} parent=11 // pred_check
          %p535 = pneg %p351
        $region46: #{encoder_forward.1} parent=11 // pred_check_branch
          %537 = sbr.rel (%p535) target = $region48
        $region47: #{encoder_forward.1} parent=11 // pred_region
          %s539 = ssub.s32 256, 256
          %540 = vsyncadd [#allocation21], %s539
          %s541 = sshll.u32 [#allocation22], 4
          %s542 = int_to_ptr.vmem [resolvable:$true] %s541
          %547 = dma.hbm_to_vmem [thread:$0]  %s12, 256, %s542, [#allocation21], 64, 64, 4
        $region48: #{encoder_forward.1} parent=11 // pred_fallthru
          _
        // Predicated region
        $region49: #{encoder_forward.1} parent=11 // pred_check
          %p548 = pneg %p372
        $region50: #{encoder_forward.1} parent=11 // pred_check_branch
          %550 = sbr.rel (%p548) target = $region52
        $region51: #{encoder_forward.1} parent=11 // pred_region
          %s552 = ssub.s32 16, 16
          %553 = vsyncadd [#allocation24], %s552
          %s555 = sshll.u32 [#allocation23], 4
          %s556 = int_to_ptr.vmem [resolvable:$true] %s555
          %558 = dma.hbm_to_vmem [thread:$0]  %s13, 16, %s556, [#allocation24]
        $region52: #{encoder_forward.1} parent=11 // pred_fallthru
          _
      $region12: #{encoder_forward.1} parent=5 // pred_fallthru
        _
      %p559 = scmp.lt.s32.totalorder %s42, 2
      // Predicated region
      $region53: #{encoder_forward.1} parent=5 // pred_check
        %p560 = pneg %p559
      $region54: #{encoder_forward.1} parent=5 // pred_check_branch
        %562 = sbr.rel (%p560) target = $region56
      $region55: #{encoder_forward.1} parent=5 // pred_region
        // Predicated region
        $region57: #{encoder_forward.1} parent=55 // pred_check
          %p563 = pneg %p76
        $region58: #{encoder_forward.1} parent=55 // pred_check_branch
          %565 = sbr.rel (%p563) target = $region60
        $region59: #{encoder_forward.1} parent=55 // pred_region
          %s566 = sand.u32 %s66, 1
          %s567 = scalar_lea.sflag [#allocation3], %s566
          %s568 = sand.u32 %s66, 1
          %s569 = smul.addr %s568, 8
          %s570 = scalar_lea.vmem [#allocation2], %s569
          %s572 = ssub.s32 128, 128
          %573 = vsyncadd %s567, %s572
          %s574 = sadd.s32 %s50, %s49
          %s575 = smul.addr %s574, 128
          %s576 = scalar_lea.hbm %s0, %s575
          %s578 = sshll.u32 %s570, 4
          %s579 = int_to_ptr.vmem [resolvable:$true] %s578
          %581 = dma.hbm_to_vmem [thread:$0]  %s576, 128, %s579, %s567
        $region60: #{encoder_forward.1} parent=55 // pred_fallthru
          _
        // Predicated region
        $region61: #{encoder_forward.1} parent=55 // pred_check
          %p582 = pneg %p102
        $region62: #{encoder_forward.1} parent=55 // pred_check_branch
          %584 = sbr.rel (%p582) target = $region64
        $region63: #{encoder_forward.1} parent=55 // pred_region
          %s585 = sand.u32 %s42, 1
          %s586 = scalar_lea.sflag [#allocation6], %s585
          %s587 = sand.u32 %s92, 1
          %s588 = smul.addr %s587, 4
          %s589 = scalar_lea.vmem [#allocation5], %s588
          %s591 = ssub.s32 64, 64
          %592 = vsyncadd %s586, %s591
          %s593 = smul.addr %s49, 64
          %s594 = scalar_lea.hbm %s1, %s593
          %s596 = sshll.u32 %s589, 4
          %s597 = int_to_ptr.vmem [resolvable:$true] %s596
          %599 = dma.hbm_to_vmem [thread:$0]  %s594, 64, %s597, %s586
        $region64: #{encoder_forward.1} parent=55 // pred_fallthru
          _
        // Predicated region
        $region65: #{encoder_forward.1} parent=55 // pred_check
          %p600 = pneg %p128
        $region66: #{encoder_forward.1} parent=55 // pred_check_branch
          %602 = sbr.rel (%p600) target = $region68
        $region67: #{encoder_forward.1} parent=55 // pred_region
          %s603 = sand.u32 %s42, 1
          %s604 = scalar_lea.sflag [#allocation6], %s603
          %s605 = sand.u32 %s118, 1
          %s606 = smul.addr %s605, 4
          %s607 = scalar_lea.vmem [#allocation7], %s606
          %s609 = ssub.s32 64, 64
          %610 = vsyncadd %s604, %s609
          %s611 = smul.addr %s49, 64
          %s612 = scalar_lea.hbm %s2, %s611
          %s614 = sshll.u32 %s607, 4
          %s615 = int_to_ptr.vmem [resolvable:$true] %s614
          %617 = dma.hbm_to_vmem [thread:$0]  %s612, 64, %s615, %s604
        $region68: #{encoder_forward.1} parent=55 // pred_fallthru
          _
        // Predicated region
        $region69: #{encoder_forward.1} parent=55 // pred_check
          %p618 = pneg %p156
        $region70: #{encoder_forward.1} parent=55 // pred_check_branch
          %620 = sbr.rel (%p618) target = $region72
        $region71: #{encoder_forward.1} parent=55 // pred_region
          %s621 = sand.u32 %s42, 1
          %s622 = scalar_lea.sflag [#allocation9], %s621
          %s623 = sand.u32 %s146, 1
          %s624 = smul.addr %s623, 4
          %s625 = scalar_lea.vmem [#allocation8], %s624
          %s627 = ssub.s32 64, 64
          %628 = vsyncadd %s622, %s627
          %s629 = sadd.s32 %s50, %s49
          %s630 = smul.addr %s629, 64
          %s631 = scalar_lea.hbm %s3, %s630
          %s633 = sshll.u32 %s625, 4
          %s634 = int_to_ptr.vmem [resolvable:$true] %s633
          %636 = dma.hbm_to_vmem [thread:$0]  %s631, 64, %s634, %s622
        $region72: #{encoder_forward.1} parent=55 // pred_fallthru
          _
      $region56: #{encoder_forward.1} parent=5 // pred_fallthru
        _
      %p637 = scmp.le.s32.totalorder 1, %s42
      %p638 = scmp.lt.s32.totalorder %s42, 3
      %p639 = pnand %p637, %p638
      %p640 = pneg %p639
      // Predicated region
      $region73: #{encoder_forward.1} parent=5 // pred_check
        _
      $region74: #{encoder_forward.1} parent=5 // pred_check_branch
        %642 = sbr.rel (%p639) target = $region76
      $region75: #{encoder_forward.1} parent=5 // pred_region
        %s643 = ssub.s32 %s42, 1
        %s644 = sand.u32 %s69, 1
        %s645 = scalar_lea.sflag [#allocation3], %s644
        %s646 = sand.u32 %s69, 1
        %s647 = smul.addr %s646, 8
        %s648 = scalar_lea.vmem [#allocation2], %s647
        // Predicated region
        $region77: #{encoder_forward.1} parent=75 // pred_check
          %p649 = pneg %p82
        $region78: #{encoder_forward.1} parent=75 // pred_check_branch
          %651 = sbr.rel (%p649) target = $region80
        $region79: #{encoder_forward.1} parent=75 // pred_region
          %652 = dma.done %s645, 128
        $region80: #{encoder_forward.1} parent=75 // pred_fallthru
          _
        %s653 = sand.u32 %s47, 1
        %s654 = scalar_lea.sflag [#allocation6], %s653
        %s655 = sand.u32 %s95, 1
        %s656 = smul.addr %s655, 4
        %s657 = scalar_lea.vmem [#allocation5], %s656
        // Predicated region
        $region81: #{encoder_forward.1} parent=75 // pred_check
          %p658 = pneg %p108
        $region82: #{encoder_forward.1} parent=75 // pred_check_branch
          %660 = sbr.rel (%p658) target = $region84
        $region83: #{encoder_forward.1} parent=75 // pred_region
          %661 = dma.done %s654, 64
        $region84: #{encoder_forward.1} parent=75 // pred_fallthru
          _
        %s662 = sand.u32 %s47, 1
        %s663 = scalar_lea.sflag [#allocation6], %s662
        %s664 = sand.u32 %s121, 1
        %s665 = smul.addr %s664, 4
        %s666 = scalar_lea.vmem [#allocation7], %s665
        // Predicated region
        $region85: #{encoder_forward.1} parent=75 // pred_check
          %p667 = pneg %p134
        $region86: #{encoder_forward.1} parent=75 // pred_check_branch
          %669 = sbr.rel (%p667) target = $region88
        $region87: #{encoder_forward.1} parent=75 // pred_region
          %670 = dma.done %s663, 64
        $region88: #{encoder_forward.1} parent=75 // pred_fallthru
          _
        %s671 = sand.u32 %s47, 1
        %s672 = scalar_lea.sflag [#allocation9], %s671
        %s673 = sand.u32 %s149, 1
        %s674 = smul.addr %s673, 4
        %s675 = scalar_lea.vmem [#allocation8], %s674
        // Predicated region
        $region89: #{encoder_forward.1} parent=75 // pred_check
          %p676 = pneg %p162
        $region90: #{encoder_forward.1} parent=75 // pred_check_branch
          %678 = sbr.rel (%p676) target = $region92
        $region91: #{encoder_forward.1} parent=75 // pred_region
          %679 = dma.done %s672, 64
        $region92: #{encoder_forward.1} parent=75 // pred_fallthru
          _
        // Predicated region
        $region93: #{encoder_forward.1} parent=75 // pred_check
          %p680 = pneg %p183
        $region94: #{encoder_forward.1} parent=75 // pred_check_branch
          %682 = sbr.rel (%p680) target = $region96
        $region95: #{encoder_forward.1} parent=75 // pred_region
          %683 = dma.done [#allocation9], 256
        $region96: #{encoder_forward.1} parent=75 // pred_fallthru
          _
        // Predicated region
        $region97: #{encoder_forward.1} parent=75 // pred_check
          %p684 = pneg %p204
        $region98: #{encoder_forward.1} parent=75 // pred_check_branch
          %686 = sbr.rel (%p684) target = $region100
        $region99: #{encoder_forward.1} parent=75 // pred_region
          %687 = dma.done [#allocation12], 16
        $region100: #{encoder_forward.1} parent=75 // pred_fallthru
          _
        // Predicated region
        $region101: #{encoder_forward.1} parent=75 // pred_check
          %p688 = pneg %p225
        $region102: #{encoder_forward.1} parent=75 // pred_check_branch
          %690 = sbr.rel (%p688) target = $region104
        $region103: #{encoder_forward.1} parent=75 // pred_region
          %691 = dma.done [#allocation12], 512
        $region104: #{encoder_forward.1} parent=75 // pred_fallthru
          _
        // Predicated region
        $region105: #{encoder_forward.1} parent=75 // pred_check
          %p692 = pneg %p246
        $region106: #{encoder_forward.1} parent=75 // pred_check_branch
          %694 = sbr.rel (%p692) target = $region108
        $region107: #{encoder_forward.1} parent=75 // pred_region
          %695 = dma.done [#allocation15], 16
        $region108: #{encoder_forward.1} parent=75 // pred_fallthru
          _
        // Predicated region
        $region109: #{encoder_forward.1} parent=75 // pred_check
          %p696 = pneg %p267
        $region110: #{encoder_forward.1} parent=75 // pred_check_branch
          %698 = sbr.rel (%p696) target = $region112
        $region111: #{encoder_forward.1} parent=75 // pred_region
          %699 = dma.done [#allocation15], 16
        $region112: #{encoder_forward.1} parent=75 // pred_fallthru
          _
        // Predicated region
        $region113: #{encoder_forward.1} parent=75 // pred_check
          %p700 = pneg %p288
        $region114: #{encoder_forward.1} parent=75 // pred_check_branch
          %702 = sbr.rel (%p700) target = $region116
        $region115: #{encoder_forward.1} parent=75 // pred_region
          %703 = dma.done [#allocation18], 16
        $region116: #{encoder_forward.1} parent=75 // pred_fallthru
          _
        // Predicated region
        $region117: #{encoder_forward.1} parent=75 // pred_check
          %p704 = pneg %p309
        $region118: #{encoder_forward.1} parent=75 // pred_check_branch
          %706 = sbr.rel (%p704) target = $region120
        $region119: #{encoder_forward.1} parent=75 // pred_region
          %707 = dma.done [#allocation18], 16
        $region120: #{encoder_forward.1} parent=75 // pred_fallthru
          _
        // Predicated region
        $region121: #{encoder_forward.1} parent=75 // pred_check
          %p708 = pneg %p330
        $region122: #{encoder_forward.1} parent=75 // pred_check_branch
          %710 = sbr.rel (%p708) target = $region124
        $region123: #{encoder_forward.1} parent=75 // pred_region
          %711 = dma.done [#allocation21], 16
        $region124: #{encoder_forward.1} parent=75 // pred_fallthru
          _
        // Predicated region
        $region125: #{encoder_forward.1} parent=75 // pred_check
          %p712 = pneg %p351
        $region126: #{encoder_forward.1} parent=75 // pred_check_branch
          %714 = sbr.rel (%p712) target = $region128
        $region127: #{encoder_forward.1} parent=75 // pred_region
          %715 = dma.done [#allocation21], 256
        $region128: #{encoder_forward.1} parent=75 // pred_fallthru
          _
        // Predicated region
        $region129: #{encoder_forward.1} parent=75 // pred_check
          %p716 = pneg %p372
        $region130: #{encoder_forward.1} parent=75 // pred_check_branch
          %718 = sbr.rel (%p716) target = $region132
        $region131: #{encoder_forward.1} parent=75 // pred_region
          %719 = dma.done [#allocation24], 16
        $region132: #{encoder_forward.1} parent=75 // pred_fallthru
          _
        %s720 = sand.u32 %s69, 1
        %s721 = scalar_lea.sflag [#allocation3], %s720
        %s722 = sand.u32 %s69, 1
        %s723 = smul.addr %s722, 8
        %s724 = scalar_lea.vmem [#allocation2], %s723
        %p725 = pneg %p82
        %p726 = pneg %p79
        %s727 = sand.u32 %s47, 1
        %s728 = scalar_lea.sflag [#allocation6], %s727
        %s729 = sand.u32 %s95, 1
        %s730 = smul.addr %s729, 4
        %s731 = scalar_lea.vmem [#allocation5], %s730
        %p732 = pneg %p108
        %p733 = pneg %p105
        %s734 = sand.u32 %s47, 1
        %s735 = scalar_lea.sflag [#allocation6], %s734
        %s736 = sand.u32 %s121, 1
        %s737 = smul.addr %s736, 4
        %s738 = scalar_lea.vmem [#allocation7], %s737
        %p739 = pneg %p134
        %p740 = pneg %p131
        %s741 = sand.u32 %s47, 1
        %s742 = scalar_lea.sflag [#allocation9], %s741
        %s743 = sand.u32 %s149, 1
        %s744 = smul.addr %s743, 4
        %s745 = scalar_lea.vmem [#allocation8], %s744
        %p746 = pneg %p162
        %p747 = pneg %p159
        %p748 = pneg %p183
        %p749 = pneg %p180
        %p750 = pneg %p204
        %p751 = pneg %p201
        %p752 = pneg %p225
        %p753 = pneg %p222
        %p754 = pneg %p246
        %p755 = pneg %p243
        %p756 = pneg %p267
        %p757 = pneg %p264
        %p758 = pneg %p288
        %p759 = pneg %p285
        %p760 = pneg %p309
        %p761 = pneg %p306
        %p762 = pneg %p330
        %p763 = pneg %p327
        %p764 = pneg %p351
        %p765 = pneg %p348
        %p766 = pneg %p372
        %p767 = pneg %p369
        %p768 = pneg %p400
        %p769 = pneg %p397
        %s770 = sand.u32 %s387, 1
        %s771 = scalar_lea.sflag [#allocation4], %s770
        %s772 = sand.u32 %s387, 1
        %s773 = smul.addr %s772, 8
        %s774 = scalar_lea.vmem [#allocation25], %s773
        %p775 = pneg %p428
        %p776 = pneg %p425
        %s777 = sand.u32 %s415, 1
        %s778 = scalar_lea.sflag [#allocation27], %s777
        %s779 = sand.u32 %s415, 1
        %s780 = smul.addr %s779, 4
        %s781 = scalar_lea.vmem [#allocation26], %s780
        %v783 = vld [vmem:[%s648] sm:$0xff]
        %v784 = vld [vmem:[%s675] sm:$0xf]
        %v785 = vunpack.c.l.bf16 %v784
        %v786 = vmul.f32 %v783, 0.17677669
        %v787 = vpack.c.bf16 %v786, %v786
        %v788 = vld [vmem:[%s657] sm:$0xf]
        %v789 = vld [vmem:[%s666] sm:$0xf]
        %vm790 = vcmask 261120
        %v792 = vsel %vm790, %v787, 0
        %v795 = vsel %vm790, %v788, 0
        %797 = vmatprep.subr.bf16.mxu0 0
        %798 = vmatpush1.bf16.xpose.msra.mxu0 %v795
        %799 = vmatprep.subr.bf16.mxu0 0
        %800 = vmatpush1.bf16.xpose.msra.mxu0 0
        %801 = vmatprep.subr.bf16.mxu0 0
        %802 = vmatpush1.bf16.xpose.msra.mxu0 0
        %803 = vmatprep.subr.bf16.mxu0 0
        %804 = vmatpush1.bf16.xpose.msra.mxu0 0
        %805 = vmatprep.subr.bf16.mxu0 0
        %806 = vmatpush1.bf16.xpose.msra.mxu0 0
        %807 = vmatprep.subr.bf16.mxu0 0
        %808 = vmatpush1.bf16.xpose.msra.mxu0 0
        %809 = vmatprep.subr.bf16.mxu0 0
        %810 = vmatpush1.bf16.xpose.msra.mxu0 0
        %811 = vmatprep.subr.bf16.mxu0 0
        %812 = vmatpush1.bf16.xpose.msra.mxu0 0
        %813 = vmatprep.subr.bf16.mxu0 0
        %814 = vmatpush1.bf16.xpose.msra.mxu0 0
        %815 = vmatprep.subr.bf16.mxu0 0
        %816 = vmatpush1.bf16.xpose.msra.mxu0 0
        %817 = vmatprep.subr.bf16.mxu0 0
        %818 = vmatpush1.bf16.xpose.msra.mxu0 0
        %819 = vmatprep.subr.bf16.mxu0 0
        %820 = vmatpush1.bf16.xpose.msra.mxu0 0
        %821 = vmatprep.subr.bf16.mxu0 0
        %822 = vmatpush1.bf16.xpose.msra.mxu0 0
        %823 = vmatprep.subr.bf16.mxu0 0
        %824 = vmatpush1.bf16.xpose.msra.mxu0 0
        %825 = vmatprep.subr.bf16.mxu0 0
        %826 = vmatpush1.bf16.xpose.msra.mxu0 0
        %827 = vmatprep.subr.bf16.mxu0 0
        %828 = vmatpush1.bf16.xpose.msra.mxu0 0
        %829 = vmatprep.mubr.bf16.mxu0 0
        %830 = vmatmul.mubr.bf16.gmra.mrb[0].mxu0 %v792
        %v831 = vpop.f32.mrb[0].mxu0
        %v832 = vadd.f32 %v785, %v831
        %v833 = vpop.f32.mrb[0].mxu0
        %v834 = vpop.f32.mrb[0].mxu0
        %v835 = vpop.f32.mrb[0].mxu0
        %836 = vdwg.mxu0
        %vm837 = vcmask 64512
        %v838 = vsel %vm837, %v832, -inf
        %839 = vmax.xlane.f32.xlu0 %v838
        %v840 = vpop.xlane.xlu0 %839
        %v841 = vsub.f32 %v832, %v840
        %v842 = vmul.f32 %v841, 1.442695
        %v843 = vpow.pop %v842
        %v844 = vsel %vm837, %v843, 0.0
        %845 = vadd.xlane.f32.xlu0 %v844
        %v846 = vpop.xlane.xlu0 %845
        %v847 = vrcp.pop %v846
        %v848 = vmul.f32 %v843, %v847
        %v849 = vpack.c.bf16 %v848, %v848
        %v851 = vsel %vm837, %v849, 0
        %vm853 = vcmask 1043456
        %v855 = vsel %vm853, %v789, 0
        %857 = vmatprep.subr.bf16.mxu0 0
        %858 = vmatpush1.bf16.msra.mxu0 %v855
        %859 = vmatprep.subr.bf16.mxu0 0
        %860 = vmatpush1.bf16.msra.mxu0 0
        %861 = vmatprep.subr.bf16.mxu0 0
        %862 = vmatpush1.bf16.msra.mxu0 0
        %863 = vmatprep.subr.bf16.mxu0 0
        %864 = vmatpush1.bf16.msra.mxu0 0
        %865 = vmatprep.subr.bf16.mxu0 0
        %866 = vmatpush1.bf16.msra.mxu0 0
        %867 = vmatprep.subr.bf16.mxu0 0
        %868 = vmatpush1.bf16.msra.mxu0 0
        %869 = vmatprep.subr.bf16.mxu0 0
        %870 = vmatpush1.bf16.msra.mxu0 0
        %871 = vmatprep.subr.bf16.mxu0 0
        %872 = vmatpush1.bf16.msra.mxu0 0
        %873 = vmatprep.subr.bf16.mxu0 0
        %874 = vmatpush1.bf16.msra.mxu0 0
        %875 = vmatprep.subr.bf16.mxu0 0
        %876 = vmatpush1.bf16.msra.mxu0 0
        %877 = vmatprep.subr.bf16.mxu0 0
        %878 = vmatpush1.bf16.msra.mxu0 0
        %879 = vmatprep.subr.bf16.mxu0 0
        %880 = vmatpush1.bf16.msra.mxu0 0
        %881 = vmatprep.subr.bf16.mxu0 0
        %882 = vmatpush1.bf16.msra.mxu0 0
        %883 = vmatprep.subr.bf16.mxu0 0
        %884 = vmatpush1.bf16.msra.mxu0 0
        %885 = vmatprep.subr.bf16.mxu0 0
        %886 = vmatpush1.bf16.msra.mxu0 0
        %887 = vmatprep.subr.bf16.mxu0 0
        %888 = vmatpush1.bf16.msra.mxu0 0
        %889 = vmatprep.mubr.bf16.mxu0 0
        %890 = vmatmul.mubr.bf16.gmra.mrb[0].mxu0 %v851
        %v891 = vpop.f32.mrb[0].mxu0
        %v892 = vadd.f32 %v783, %v891
        %v893 = vpop.f32.mrb[0].mxu0
        %v894 = vpop.f32.mrb[0].mxu0
        %v895 = vpop.f32.mrb[0].mxu0
        %896 = vdwg.mxu0
        %v897 = vld [vmem:[#allocation16] sm:$0x1]
        %v898 = vld [vmem:[#allocation17] sm:$0x1]
        %v899 = vsel %vm790, %v892, 0.0
        %900 = vadd.xlane.f32.xlu0 %v899
        %v901 = vpop.xlane.xlu0 %900
        %v902 = vrcp.pop 32.0
        %v903 = vmul.f32 %v901, %v902
        %v904 = vsub.f32 %v892, %v903
        %v905 = vmul.f32 %v904, %v904
        %v906 = vsel %vm790, %v905, 0.0
        %907 = vadd.xlane.f32.xlu0 %v906
        %v908 = vpop.xlane.xlu0 %907
        %v909 = vmul.f32 %v908, %v902
        %v910 = vadd.f32 %v909, 1e-05
        %v911 = vrsqrt.pop %v910
        %v912 = vmul.f32 %v904, %v911
        %v914 = vlaneseq
        %v915 = vshrl.u32 %v914, 7
        %v916 = vsub.s32 0, %v915
        %v917 = vrot.slane %v897, %v916
        %v919 = vmul.f32 %v912, %v917
        %v921 = vlaneseq
        %v922 = vshrl.u32 %v921, 7
        %v923 = vsub.s32 0, %v922
        %v924 = vrot.slane %v898, %v923
        %v926 = vadd.f32 %v919, %v924
        %v927 = vpack.c.bf16 %v926, %v926
        %v928 = vld [vmem:[#allocation10] sm:$0xf]
        %v929 = vld [vmem:[#allocation10 + $0x4] sm:$0xf]
        %v930 = vld [vmem:[#allocation10 + $0x8] sm:$0xf]
        %v931 = vld [vmem:[#allocation10 + $0xc] sm:$0xf]
        %v932 = vld [vmem:[#allocation11] sm:$0x1]
        %v934 = vlaneseq
        %v935 = vshrl.u32 %v934, 7
        %v936 = vsub.s32 0, %v935
        %v937 = vrot.slane %v932, %v936
        %v943 = vunpack.c.l.b16 %v928
        %v944 = vunpack.c.l.b16 %v929
        %v945 = vunpack.c.l.b16 %v930
        %v946 = vunpack.c.l.b16 %v931
        %v947 = vpack.c.b16 %v944, %v943
        %v948 = vpack.c.b16 %v946, %v945
        %v952 = vsel %vm790, %v927, 0
        %954 = vmatprep.subr.bf16.mxu0 0
        %955 = vmatpush1.bf16.msra.mxu0 %v947
        %956 = vmatprep.subr.bf16.mxu0 0
        %957 = vmatpush1.bf16.msra.mxu0 %v948
        %958 = vmatprep.subr.bf16.mxu0 0
        %959 = vmatpush1.bf16.msra.mxu0 0
        %960 = vmatprep.subr.bf16.mxu0 0
        %961 = vmatpush1.bf16.msra.mxu0 0
        %962 = vmatprep.subr.bf16.mxu0 0
        %963 = vmatpush1.bf16.msra.mxu0 0
        %964 = vmatprep.subr.bf16.mxu0 0
        %965 = vmatpush1.bf16.msra.mxu0 0
        %966 = vmatprep.subr.bf16.mxu0 0
        %967 = vmatpush1.bf16.msra.mxu0 0
        %968 = vmatprep.subr.bf16.mxu0 0
        %969 = vmatpush1.bf16.msra.mxu0 0
        %970 = vmatprep.subr.bf16.mxu0 0
        %971 = vmatpush1.bf16.msra.mxu0 0
        %972 = vmatprep.subr.bf16.mxu0 0
        %973 = vmatpush1.bf16.msra.mxu0 0
        %974 = vmatprep.subr.bf16.mxu0 0
        %975 = vmatpush1.bf16.msra.mxu0 0
        %976 = vmatprep.subr.bf16.mxu0 0
        %977 = vmatpush1.bf16.msra.mxu0 0
        %978 = vmatprep.subr.bf16.mxu0 0
        %979 = vmatpush1.bf16.msra.mxu0 0
        %980 = vmatprep.subr.bf16.mxu0 0
        %981 = vmatpush1.bf16.msra.mxu0 0
        %982 = vmatprep.subr.bf16.mxu0 0
        %983 = vmatpush1.bf16.msra.mxu0 0
        %984 = vmatprep.subr.bf16.mxu0 0
        %985 = vmatpush1.bf16.msra.mxu0 0
        %986 = vmatprep.mubr.bf16.mxu0 0
        %987 = vmatmul.mubr.bf16.gmra.mrb[0].mxu0 %v952
        %v988 = vpop.f32.mrb[0].mxu0
        %v989 = vadd.f32 %v937, %v988
        %v990 = vpop.f32.mrb[0].mxu0
        %v991 = vpop.f32.mrb[0].mxu0
        %v992 = vpop.f32.mrb[0].mxu0
        %993 = vdwg.mxu0
        %v994 = vmax.f32 %v989, 0.0
        %v995 = vpack.c.bf16 %v994, %v994
        %v996 = vld [vmem:[#allocation13] sm:$0xf]
        %v997 = vld [vmem:[#allocation13 + $0x4] sm:$0xf]
        %v998 = vld [vmem:[#allocation13 + $0x8] sm:$0xf]
        %v999 = vld [vmem:[#allocation13 + $0xc] sm:$0xf]
        %v1000 = vld [vmem:[#allocation13 + $0x10] sm:$0xf]
        %v1001 = vld [vmem:[#allocation13 + $0x14] sm:$0xf]
        %v1002 = vld [vmem:[#allocation13 + $0x18] sm:$0xf]
        %v1003 = vld [vmem:[#allocation13 + $0x1c] sm:$0xf]
        %v1004 = vld [vmem:[#allocation14] sm:$0x1]
        %v1006 = vlaneseq
        %v1007 = vshrl.u32 %v1006, 7
        %v1008 = vsub.s32 0, %v1007
        %v1009 = vrot.slane %v1004, %v1008
        %v1019 = vunpack.c.l.b16 %v996
        %v1020 = vunpack.c.l.b16 %v997
        %v1021 = vunpack.c.l.b16 %v998
        %v1022 = vunpack.c.l.b16 %v999
        %v1023 = vunpack.c.l.b16 %v1000
        %v1024 = vunpack.c.l.b16 %v1001
        %v1025 = vunpack.c.l.b16 %v1002
        %v1026 = vunpack.c.l.b16 %v1003
        %v1027 = vpack.c.b16 %v1020, %v1019
        %v1028 = vpack.c.b16 %v1022, %v1021
        %v1029 = vpack.c.b16 %v1024, %v1023
        %v1030 = vpack.c.b16 %v1026, %v1025
        %vm1035 = vcmask 523264
        %v1037 = vsel %vm1035, %v995, 0
        %1039 = vmatprep.subr.bf16.mxu0 0
        %1040 = vmatpush1.bf16.msra.mxu0 %v1027
        %1041 = vmatprep.subr.bf16.mxu0 0
        %1042 = vmatpush1.bf16.msra.mxu0 %v1028
        %1043 = vmatprep.subr.bf16.mxu0 0
        %1044 = vmatpush1.bf16.msra.mxu0 %v1029
        %1045 = vmatprep.subr.bf16.mxu0 0
        %1046 = vmatpush1.bf16.msra.mxu0 %v1030
        %1047 = vmatprep.subr.bf16.mxu0 0
        %1048 = vmatpush1.bf16.msra.mxu0 0
        %1049 = vmatprep.subr.bf16.mxu0 0
        %1050 = vmatpush1.bf16.msra.mxu0 0
        %1051 = vmatprep.subr.bf16.mxu0 0
        %1052 = vmatpush1.bf16.msra.mxu0 0
        %1053 = vmatprep.subr.bf16.mxu0 0
        %1054 = vmatpush1.bf16.msra.mxu0 0
        %1055 = vmatprep.subr.bf16.mxu0 0
        %1056 = vmatpush1.bf16.msra.mxu0 0
        %1057 = vmatprep.subr.bf16.mxu0 0
        %1058 = vmatpush1.bf16.msra.mxu0 0
        %1059 = vmatprep.subr.bf16.mxu0 0
        %1060 = vmatpush1.bf16.msra.mxu0 0
        %1061 = vmatprep.subr.bf16.mxu0 0
        %1062 = vmatpush1.bf16.msra.mxu0 0
        %1063 = vmatprep.subr.bf16.mxu0 0
        %1064 = vmatpush1.bf16.msra.mxu0 0
        %1065 = vmatprep.subr.bf16.mxu0 0
        %1066 = vmatpush1.bf16.msra.mxu0 0
        %1067 = vmatprep.subr.bf16.mxu0 0
        %1068 = vmatpush1.bf16.msra.mxu0 0
        %1069 = vmatprep.subr.bf16.mxu0 0
        %1070 = vmatpush1.bf16.msra.mxu0 0
        %1071 = vmatprep.mubr.bf16.mxu0 0
        %1072 = vmatmul.mubr.bf16.gmra.mrb[0].mxu0 %v1037
        %v1073 = vpop.f32.mrb[0].mxu0
        %v1074 = vadd.f32 %v1009, %v1073
        %v1075 = vpop.f32.mrb[0].mxu0
        %v1076 = vpop.f32.mrb[0].mxu0
        %v1077 = vpop.f32.mrb[0].mxu0
        %1078 = vdwg.mxu0
        %v1079 = vadd.f32 %v926, %v1074
        %v1080 = vld [vmem:[#allocation19] sm:$0x1]
        %v1081 = vld [vmem:[#allocation20] sm:$0x1]
        %v1082 = vsel %vm790, %v1079, 0.0
        %1083 = vadd.xlane.f32.xlu0 %v1082
        %v1084 = vpop.xlane.xlu0 %1083
        %v1085 = vmul.f32 %v1084, %v902
        %v1086 = vsub.f32 %v1079, %v1085
        %v1087 = vmul.f32 %v1086, %v1086
        %v1088 = vsel %vm790, %v1087, 0.0
        %1089 = vadd.xlane.f32.xlu0 %v1088
        %v1090 = vpop.xlane.xlu0 %1089
        %v1091 = vmul.f32 %v1090, %v902
        %v1092 = vadd.f32 %v1091, 1e-05
        %v1093 = vrsqrt.pop %v1092
        %v1094 = vmul.f32 %v1086, %v1093
        %v1096 = vlaneseq
        %v1097 = vshrl.u32 %v1096, 7
        %v1098 = vsub.s32 0, %v1097
        %v1099 = vrot.slane %v1080, %v1098
        %v1101 = vmul.f32 %v1094, %v1099
        %v1103 = vlaneseq
        %v1104 = vshrl.u32 %v1103, 7
        %v1105 = vsub.s32 0, %v1104
        %v1106 = vrot.slane %v1081, %v1105
        %v1108 = vadd.f32 %v1101, %v1106
        %v1109 = vpack.c.bf16 %v1108, %v1108
        %v1110 = vld [vmem:[#allocation22] sm:$0xf]
        %v1111 = vld [vmem:[#allocation22 + $0x4] sm:$0xf]
        %v1112 = vld [vmem:[#allocation22 + $0x8] sm:$0xf]
        %v1113 = vld [vmem:[#allocation22 + $0xc] sm:$0xf]
        %v1114 = vld [vmem:[#allocation23] sm:$0x1]
        %v1116 = vlaneseq
        %v1117 = vshrl.u32 %v1116, 7
        %v1118 = vsub.s32 0, %v1117
        %v1119 = vrot.slane %v1114, %v1118
        %v1125 = vunpack.c.l.b16 %v1110
        %v1126 = vunpack.c.l.b16 %v1111
        %v1127 = vunpack.c.l.b16 %v1112
        %v1128 = vunpack.c.l.b16 %v1113
        %v1129 = vpack.c.b16 %v1126, %v1125
        %v1130 = vpack.c.b16 %v1128, %v1127
        %v1134 = vsel %vm790, %v1109, 0
        %1136 = vmatprep.subr.bf16.mxu0 0
        %1137 = vmatpush1.bf16.msra.mxu0 %v1129
        %1138 = vmatprep.subr.bf16.mxu0 0
        %1139 = vmatpush1.bf16.msra.mxu0 %v1130
        %1140 = vmatprep.subr.bf16.mxu0 0
        %1141 = vmatpush1.bf16.msra.mxu0 0
        %1142 = vmatprep.subr.bf16.mxu0 0
        %1143 = vmatpush1.bf16.msra.mxu0 0
        %1144 = vmatprep.subr.bf16.mxu0 0
        %1145 = vmatpush1.bf16.msra.mxu0 0
        %1146 = vmatprep.subr.bf16.mxu0 0
        %1147 = vmatpush1.bf16.msra.mxu0 0
        %1148 = vmatprep.subr.bf16.mxu0 0
        %1149 = vmatpush1.bf16.msra.mxu0 0
        %1150 = vmatprep.subr.bf16.mxu0 0
        %1151 = vmatpush1.bf16.msra.mxu0 0
        %1152 = vmatprep.subr.bf16.mxu0 0
        %1153 = vmatpush1.bf16.msra.mxu0 0
        %1154 = vmatprep.subr.bf16.mxu0 0
        %1155 = vmatpush1.bf16.msra.mxu0 0
        %1156 = vmatprep.subr.bf16.mxu0 0
        %1157 = vmatpush1.bf16.msra.mxu0 0
        %1158 = vmatprep.subr.bf16.mxu0 0
        %1159 = vmatpush1.bf16.msra.mxu0 0
        %1160 = vmatprep.subr.bf16.mxu0 0
        %1161 = vmatpush1.bf16.msra.mxu0 0
        %1162 = vmatprep.subr.bf16.mxu0 0
        %1163 = vmatpush1.bf16.msra.mxu0 0
        %1164 = vmatprep.subr.bf16.mxu0 0
        %1165 = vmatpush1.bf16.msra.mxu0 0
        %1166 = vmatprep.subr.bf16.mxu0 0
        %1167 = vmatpush1.bf16.msra.mxu0 0
        %1168 = vmatprep.mubr.bf16.mxu0 0
        %1169 = vmatmul.mubr.bf16.gmra.mrb[0].mxu0 %v1134
        %v1170 = vpop.f32.mrb[0].mxu0
        %v1171 = vadd.f32 %v1119, %v1170
        %v1172 = vpop.f32.mrb[0].mxu0
        %v1173 = vpop.f32.mrb[0].mxu0
        %v1174 = vpop.f32.mrb[0].mxu0
        %1175 = vdwg.mxu0
        %1176 = vst.msk [vmem:[%s774] sm:$0xff] %vm790, %v1171
        %vm1177 = vcmask 60416
        %1178 = vst.msk [vmem:[%s781] sm:$0xf] %vm1177, %v849
        %s1179 = sand.u32 %s387, 1
        %s1180 = scalar_lea.sflag [#allocation4], %s1179
        %s1181 = sand.u32 %s387, 1
        %s1182 = smul.addr %s1181, 8
        %s1183 = scalar_lea.vmem [#allocation25], %s1182
        %s1184 = sand.u32 %s415, 1
        %s1185 = scalar_lea.sflag [#allocation27], %s1184
        %s1186 = sand.u32 %s415, 1
        %s1187 = smul.addr %s1186, 4
        %s1188 = scalar_lea.vmem [#allocation26], %s1187
        // Predicated region
        $region133: #{encoder_forward.1} parent=75 // pred_check
          %p1189 = pneg %p397
        $region134: #{encoder_forward.1} parent=75 // pred_check_branch
          %1191 = sbr.rel (%p1189) target = $region136
        $region135: #{encoder_forward.1} parent=75 // pred_region
          %s1193 = ssub.s32 128, 128
          %1194 = vsyncadd %s1180, %s1193
          %s1195 = sadd.s32 %s52, %s51
          %s1196 = smul.addr %s1195, 128
          %s1197 = scalar_lea.hbm %s14, %s1196
          %s1199 = sshll.u32 %s1183, 4
          %s1200 = int_to_ptr.vmem [resolvable:$true] %s1199
          %1202 = dma.vmem_to_hbm [thread:$0]  %s1200, 128, %s1197, %s1180
        $region136: #{encoder_forward.1} parent=75 // pred_fallthru
          _
        // Predicated region
        $region137: #{encoder_forward.1} parent=75 // pred_check
          %p1203 = pneg %p425
        $region138: #{encoder_forward.1} parent=75 // pred_check_branch
          %1205 = sbr.rel (%p1203) target = $region140
        $region139: #{encoder_forward.1} parent=75 // pred_region
          %s1207 = ssub.s32 64, 64
          %1208 = vsyncadd %s1185, %s1207
          %s1209 = sadd.s32 %s52, %s51
          %s1210 = smul.addr %s1209, 64
          %s1211 = scalar_lea.hbm %s15, %s1210
          %s1213 = sshll.u32 %s1188, 4
          %s1214 = int_to_ptr.vmem [resolvable:$true] %s1213
          %1216 = dma.vmem_to_hbm [thread:$0]  %s1214, 64, %s1211, %s1185
        $region140: #{encoder_forward.1} parent=75 // pred_fallthru
          _
      $region76: #{encoder_forward.1} parent=5 // pred_fallthru
        _
      %p1217 = scmp.le.s32.totalorder 2, %s42
      // Predicated region
      $region141: #{encoder_forward.1} parent=5 // pred_check
        %p1218 = pneg %p1217
      $region142: #{encoder_forward.1} parent=5 // pred_check_branch
        %1220 = sbr.rel (%p1218) target = $region144
      $region143: #{encoder_forward.1} parent=5 // pred_region
        %s1221 = ssub.s32 %s42, 2
        // Predicated region
        $region145: #{encoder_forward.1} parent=143 // pred_check
          %p1222 = pneg %p403
        $region146: #{encoder_forward.1} parent=143 // pred_check_branch
          %1224 = sbr.rel (%p1222) target = $region148
        $region147: #{encoder_forward.1} parent=143 // pred_region
          %s1225 = sand.u32 %s388, 1
          %s1226 = scalar_lea.sflag [#allocation4], %s1225
          %s1227 = sand.u32 %s388, 1
          %s1228 = smul.addr %s1227, 8
          %s1229 = scalar_lea.vmem [#allocation25], %s1228
          %1230 = dma.done %s1226, 128
        $region148: #{encoder_forward.1} parent=143 // pred_fallthru
          _
        // Predicated region
        $region149: #{encoder_forward.1} parent=143 // pred_check
          %p1231 = pneg %p431
        $region150: #{encoder_forward.1} parent=143 // pred_check_branch
          %1233 = sbr.rel (%p1231) target = $region152
        $region151: #{encoder_forward.1} parent=143 // pred_region
          %s1234 = sand.u32 %s416, 1
          %s1235 = scalar_lea.sflag [#allocation27], %s1234
          %s1236 = sand.u32 %s416, 1
          %s1237 = smul.addr %s1236, 4
          %s1238 = scalar_lea.vmem [#allocation26], %s1237
          %1239 = dma.done %s1235, 64
        $region152: #{encoder_forward.1} parent=143 // pred_fallthru
          _
      $region144: #{encoder_forward.1} parent=5 // pred_fallthru
        _
    $region6: #{encoder_forward.1} parent=1 // loop_footer
      %s46 = sadd.s32 1, %s42
    $region7: #{encoder_forward.1} parent=1 // loop_footer_branch
      %41 = sbr.rel target = $region3
    $region8: #{encoder_forward.1} parent=1 // loop_exit
      _
    %1240 = vsyncpa [#allocation3], 1
    %s1241 = scalar_lea.sflag [#allocation3], 1
    %1242 = vsyncpa %s1241, 1
    %1243 = vsyncpa [#allocation6], 1
    %s1244 = scalar_lea.sflag [#allocation6], 1
    %1245 = vsyncpa %s1244, 1
    %1246 = vsyncpa [#allocation9], 1
    %s1247 = scalar_lea.sflag [#allocation9], 1
    %1248 = vsyncpa %s1247, 1
    %1249 = vsyncpa [#allocation12], 1
    %1250 = vsyncpa [#allocation15], 1
    %1251 = vsyncpa [#allocation18], 1
    %1252 = vsyncpa [#allocation21], 1
    %1253 = vsyncpa [#allocation24], 1
    %1254 = vsyncpa [#allocation4], 1
    %s1255 = scalar_lea.sflag [#allocation4], 1
    %1256 = vsyncpa %s1255, 1
    %1257 = vsyncpa [#allocation27], 1
    %s1258 = scalar_lea.sflag [#allocation27], 1
    %1259 = vsyncpa %s1258, 1

</llo_original>
